<compile_context>
chip_gen: v7x
topology: tpu7x:2x2x1
jax: 0.10.0
libtpu: 0.0.40
codegen_flags: <defaults>
</compile_context>

<pallas_src>
import functools
import math

import jax
import jax.numpy as jnp
from jax.experimental import pallas as pl
from jax.experimental.pallas import tpu as pltpu

_VMEM_LIMIT = 48 * 1024 * 1024  # safe on v5e/v6e (128 MiB) and v7x (64 MiB)


def _tile(dim, preferred):
    """Tile size: `preferred` if it evenly divides `dim`, else the full dim."""
    if dim <= preferred or dim % preferred != 0:
        return dim
    return preferred


# --------------------------------------------------------------------------- #
# Kernel 1: fused multi-head attention (+ LayerNorm epilogue), grid over batch.
# --------------------------------------------------------------------------- #

def _mha_ln_kernel(q_in_ref, kv_in_ref, mask_ref,
                   wq_ref, bq_ref, wkv_ref, bkv_ref, wo_ref, bo_ref,
                   g_ref, beta_ref, o_ref, *, num_heads, scale, eps):
    D = wq_ref.shape[0]
    Dh = D // num_heads

    # Projections: bf16 operands, f32 accumulation on the MXU.
    q = jnp.dot(q_in_ref[...], wq_ref[...],
                preferred_element_type=jnp.float32) + bq_ref[...]
    kv = jnp.dot(kv_in_ref[...], wkv_ref[...],
                 preferred_element_type=jnp.float32) + bkv_ref[...]
    k = kv[:, :D]
    v = kv[:, D:]
    mask = mask_ref[...]

    ctx_parts = []
    for h in range(num_heads):  # static unroll; scores stay lane-dense on Sk
        qh = q[:, h * Dh:(h + 1) * Dh].astype(jnp.bfloat16)
        kh = k[:, h * Dh:(h + 1) * Dh].astype(jnp.bfloat16)
        vh = v[:, h * Dh:(h + 1) * Dh].astype(jnp.bfloat16)
        # Contract last axes directly -> no transposed copy of K.
        s = jax.lax.dot_general(qh, kh, (((1,), (1,)), ((), ())),
                                preferred_element_type=jnp.float32) * scale
        s = jnp.where(mask == 0.0, -1e9, s)
        s = s - jnp.max(s, axis=-1, keepdims=True)
        p = jnp.exp(s)
        p = p * pl.reciprocal(jnp.sum(p, axis=-1, keepdims=True), approx=True)
        ctx_parts.append(
            jnp.dot(p.astype(jnp.bfloat16), vh,
                    preferred_element_type=jnp.float32))
    ctx = jnp.concatenate(ctx_parts, axis=-1)

    # Output projection + fused LayerNorm epilogue (f32 math).
    y = jnp.dot(ctx.astype(jnp.bfloat16), wo_ref[...],
                preferred_element_type=jnp.float32) + bo_ref[...]
    mu = jnp.mean(y, axis=-1, keepdims=True)
    var = jnp.mean((y - mu) ** 2, axis=-1, keepdims=True)
    yn = (y - mu) * jax.lax.rsqrt(var + eps)
    o_ref[...] = (yn * g_ref[...] + beta_ref[...]).astype(o_ref.dtype)


def mha_layernorm(q_in, kv_in, mask, attn_params, ln_params, *, num_heads,
                  eps=1e-5):
    # TODO(synk): for very long sequences, additionally tile Sq/Sk with an
    # online-softmax accumulator (flash-attention style) instead of keeping the
    # full [Sq, Sk] scores resident.
    B, Sq, D = q_in.shape
    Sk = kv_in.shape[1]
    scale = 1.0 / math.sqrt(D // num_heads)
    wq, bq, wkv, bkv, wo, bo = attn_params
    gamma, beta = ln_params

    return pl.pallas_call(
        functools.partial(_mha_ln_kernel, num_heads=num_heads, scale=scale,
                          eps=eps),
        out_shape=jax.ShapeDtypeStruct((B, Sq, D), jnp.bfloat16),
        grid=(B,),
        in_specs=[
            pl.BlockSpec((None, Sq, D), lambda b: (b, 0, 0)),
            pl.BlockSpec((None, Sk, D), lambda b: (b, 0, 0)),
            pl.BlockSpec((None, Sq, Sk), lambda b: (b, 0, 0)),
            pl.BlockSpec((D, D), lambda b: (0, 0)),
            pl.BlockSpec((1, D), lambda b: (0, 0)),
            pl.BlockSpec((D, 2 * D), lambda b: (0, 0)),
            pl.BlockSpec((1, 2 * D), lambda b: (0, 0)),
            pl.BlockSpec((D, D), lambda b: (0, 0)),
            pl.BlockSpec((1, D), lambda b: (0, 0)),
            pl.BlockSpec((1, D), lambda b: (0, 0)),
            pl.BlockSpec((1, D), lambda b: (0, 0)),
        ],
        out_specs=pl.BlockSpec((None, Sq, D), lambda b: (b, 0, 0)),
        compiler_params=pltpu.CompilerParams(
            dimension_semantics=("parallel",),
            vmem_limit_bytes=_VMEM_LIMIT),
    )(q_in, kv_in, mask, wq, bq, wkv, bkv, wo, bo, gamma, beta)


# --------------------------------------------------------------------------- #
# Kernel 2: fused FFN (Linear -> ReLU -> Linear) + LayerNorm, grid over tokens.
# --------------------------------------------------------------------------- #

def _ffn_ln_kernel(x_ref, w1_ref, b1_ref, w2_ref, b2_ref, g_ref, beta_ref,
                   o_ref, *, eps):
    h = jnp.dot(x_ref[...], w1_ref[...],
                preferred_element_type=jnp.float32) + b1_ref[...]
    h = jnp.maximum(h, 0.0)
    y = jnp.dot(h.astype(jnp.bfloat16), w2_ref[...],
                preferred_element_type=jnp.float32) + b2_ref[...]
    mu = jnp.mean(y, axis=-1, keepdims=True)
    var = jnp.mean((y - mu) ** 2, axis=-1, keepdims=True)
    yn = (y - mu) * jax.lax.rsqrt(var + eps)
    o_ref[...] = (yn * g_ref[...] + beta_ref[...]).astype(o_ref.dtype)


def ffn_layernorm(x2d, ff_params, ln_params, *, eps=1e-5, tm_pref=256):
    # TODO(synk): for very large d_model/d_ff, also tile the weight (K/N) dims
    # with an accumulator scratch; here the full weights stay VMEM-resident.
    M, D = x2d.shape
    w1, b1, w2, b2 = ff_params
    F = w1.shape[1]
    gamma, beta = ln_params
    tm = _tile(M, tm_pref)

    return pl.pallas_call(
        functools.partial(_ffn_ln_kernel, eps=eps),
        out_shape=jax.ShapeDtypeStruct((M, D), jnp.bfloat16),
        grid=(M // tm,),
        in_specs=[
            pl.BlockSpec((tm, D), lambda i: (i, 0)),
            pl.BlockSpec((D, F), lambda i: (0, 0)),
            pl.BlockSpec((1, F), lambda i: (0, 0)),
            pl.BlockSpec((F, D), lambda i: (0, 0)),
            pl.BlockSpec((1, D), lambda i: (0, 0)),
            pl.BlockSpec((1, D), lambda i: (0, 0)),
            pl.BlockSpec((1, D), lambda i: (0, 0)),
        ],
        out_specs=pl.BlockSpec((tm, D), lambda i: (i, 0)),
        compiler_params=pltpu.CompilerParams(
            dimension_semantics=("parallel",),
            vmem_limit_bytes=_VMEM_LIMIT),
    )(x2d, w1, b1, w2, b2, gamma, beta)


# --------------------------------------------------------------------------- #
# Kernel 3: tiled vocab projection + two-pass online softmax over vocab tiles.
#   phase 0: accumulate running row-max / sum-of-exp in VMEM scratch
#   phase 1: recompute logits tile and write normalized probabilities
# --------------------------------------------------------------------------- #

def _vocab_softmax_kernel(x_ref, w_ref, b_ref, o_ref, m_ref, l_ref):
    phase = pl.program_id(1)
    j = pl.program_id(2)

    logits = jnp.dot(x_ref[...], w_ref[...],
                     preferred_element_type=jnp.float32) + b_ref[...]

    @pl.when(jnp.logical_and(phase == 0, j == 0))
    def _():
        m_ref[...] = jnp.full(m_ref.shape, -jnp.inf, jnp.float32)
        l_ref[...] = jnp.zeros(l_ref.shape, jnp.float32)

    @pl.when(phase == 0)
    def _():
        m_prev = m_ref[...]
        m_new = jnp.maximum(m_prev, jnp.max(logits, axis=-1, keepdims=True))
        l_ref[...] = (l_ref[...] * jnp.exp(m_prev - m_new)
                      + jnp.sum(jnp.exp(logits - m_new), axis=-1, keepdims=True))
        m_ref[...] = m_new
        o_ref[...] = logits.astype(o_ref.dtype)  # placeholder, overwritten below

    @pl.when(phase == 1)
    def _():
        # Exact division for the final normalization (output-facing precision).
        o_ref[...] = (jnp.exp(logits - m_ref[...]) / l_ref[...]).astype(o_ref.dtype)


def vocab_softmax(x2d, w_out, b_out, *, tm_pref=256, tv_pref=2048):
    M, D = x2d.shape
    V = w_out.shape[1]
    tm = _tile(M, tm_pref)
    tv = _tile(V, tv_pref)

    return pl.pallas_call(
        _vocab_softmax_kernel,
        out_shape=jax.ShapeDtypeStruct((M, V), jnp.float32),
        grid=(M // tm, 2, V // tv),
        in_specs=[
            pl.BlockSpec((tm, D), lambda i, p, j: (i, 0)),
            pl.BlockSpec((D, tv), lambda i, p, j: (0, j)),
            pl.BlockSpec((1, tv), lambda i, p, j: (0, j)),
        ],
        out_specs=pl.BlockSpec((tm, tv), lambda i, p, j: (i, j)),
        scratch_shapes=[pltpu.VMEM((tm, 1), jnp.float32),
                        pltpu.VMEM((tm, 1), jnp.float32)],
        compiler_params=pltpu.CompilerParams(
            dimension_semantics=("parallel", "arbitrary", "arbitrary"),
            vmem_limit_bytes=_VMEM_LIMIT),
    )(x2d, w_out, b_out)


# --------------------------------------------------------------------------- #
# Decoder forward
# --------------------------------------------------------------------------- #

def decoder_forward(params, x, encoder_output, single_mask, double_mask, *,
                    num_heads):
    B, S, D = x.shape
    x_bf = x.astype(jnp.bfloat16)
    enc_bf = encoder_output.astype(jnp.bfloat16)

    # Self-attention + LayerNorm1 (fused). No residuals (matches reference).
    norm1 = mha_layernorm(x_bf, x_bf, double_mask,
                          params["att1"], params["ln1"], num_heads=num_heads)
    # Cross-attention + LayerNorm2 (fused).
    norm2 = mha_layernorm(norm1, enc_bf, single_mask,
                          params["att2"], params["ln2"], num_heads=num_heads)
    # FFN (Linear -> ReLU -> Linear) + LayerNorm3 (fused).
    norm3 = ffn_layernorm(norm2.reshape(B * S, D), params["ff"], params["ln3"])
    # Output projection + softmax over vocab (tiled two-pass online softmax).
    w_out, b_out = params["out"]
    probs = vocab_softmax(norm3, w_out, b_out)
    return probs.reshape(B, S, -1)


# --------------------------------------------------------------------------- #
# Parameter init (weights bf16, biases / LayerNorm params f32)
# --------------------------------------------------------------------------- #

def init_params(key, d_model, d_ff, vocab):
    def lin(k, din, dout):
        kw, kb = jax.random.split(k)
        w = jax.random.normal(kw, (din, dout), jnp.float32) / math.sqrt(din)
        b = jax.random.normal(kb, (dout,), jnp.float32) * 0.01
        return w.astype(jnp.bfloat16), b.reshape(1, dout)

    keys = jax.random.split(key, 11)
    params = {}
    for idx, name in enumerate(["att1", "att2"]):
        wq, bq = lin(keys[4 * idx + 0], d_model, d_model)
        wk, bk = lin(keys[4 * idx + 1], d_model, d_model)
        wv, bv = lin(keys[4 * idx + 2], d_model, d_model)
        wo, bo = lin(keys[4 * idx + 3], d_model, d_model)
        wkv = jnp.concatenate([wk, wv], axis=1)   # fused K|V projection weight
        bkv = jnp.concatenate([bk, bv], axis=1)
        params[name] = (wq, bq, wkv, bkv, wo, bo)
    w1, b1 = lin(keys[8], d_model, d_ff)
    w2, b2 = lin(keys[9], d_ff, d_model)
    params["ff"] = (w1, b1, w2, b2)
    params["out"] = lin(keys[10], d_model, vocab)
    for name in ["ln1", "ln2", "ln3"]:
        params[name] = (jnp.ones((1, d_model), jnp.float32),
                        jnp.zeros((1, d_model), jnp.float32))
    return params


# --------------------------------------------------------------------------- #
# Main
# --------------------------------------------------------------------------- #

if __name__ == "__main__":
    d_model, num_heads, d_ff = 32, 4, 64
    B, S, vocab = 2, 8, 16

    key = jax.random.PRNGKey(0)
    kp, kx, ke = jax.random.split(key, 3)
    params = init_params(kp, d_model, d_ff, vocab)

    x = jax.random.normal(kx, (B, S, d_model), jnp.float32)
    encoder_output = jax.random.normal(ke, (B, S, d_model), jnp.float32)

    # double_mask: causal lower-triangular; single_mask: all-ones (no padding)
    double_mask = jnp.broadcast_to(jnp.tril(jnp.ones((S, S), jnp.float32)),
                                   (B, S, S))
    single_mask = jnp.ones((B, S, S), jnp.float32)

    fwd = jax.jit(functools.partial(decoder_forward, num_heads=num_heads))
    out = jax.block_until_ready(
        fwd(params, x, encoder_output, single_mask, double_mask))

    assert out.shape == (B, S, vocab)
    row_sums = jnp.sum(out, axis=-1)
    assert bool(jnp.all(jnp.abs(row_sums - 1.0) < 1e-3))
    print("KERNEL_OK")
</pallas_src>

<mosaic_0001>
module attributes {stable_mosaic.version = 11 : i64} {
  func.func @_ffn_ln_kernel(%arg0: i32, %arg1: memref<16x32xbf16, #tpu.memory_space<vmem>>, %arg2: memref<32x64xbf16, #tpu.memory_space<vmem>>, %arg3: memref<1x64xf32, #tpu.memory_space<vmem>>, %arg4: memref<64x32xbf16, #tpu.memory_space<vmem>>, %arg5: memref<1x32xf32, #tpu.memory_space<vmem>>, %arg6: memref<1x32xf32, #tpu.memory_space<vmem>>, %arg7: memref<1x32xf32, #tpu.memory_space<vmem>>, %arg8: memref<16x32xbf16, #tpu.memory_space<vmem>>) attributes {dimension_semantics = [#tpu.dimension_semantics<parallel>], iteration_bounds = array<i64: 1>, scalar_prefetch = 0 : i64, scratch_operands = 0 : i64, tpu.core_type = #tpu.core_type<tc>, window_params = [{transform_indices = @transform_0, window_bounds = array<i64: 16, 32>}, {pipeline_mode = #tpu.pipeline_mode<synchronous>, transform_indices = @transform_1, window_bounds = array<i64: 32, 64>}, {pipeline_mode = #tpu.pipeline_mode<synchronous>, transform_indices = @transform_2, window_bounds = array<i64: 1, 64>}, {pipeline_mode = #tpu.pipeline_mode<synchronous>, transform_indices = @transform_3, window_bounds = array<i64: 64, 32>}, {pipeline_mode = #tpu.pipeline_mode<synchronous>, transform_indices = @transform_4, window_bounds = array<i64: 1, 32>}, {pipeline_mode = #tpu.pipeline_mode<synchronous>, transform_indices = @transform_5, window_bounds = array<i64: 1, 32>}, {pipeline_mode = #tpu.pipeline_mode<synchronous>, transform_indices = @transform_6, window_bounds = array<i64: 1, 32>}, {transform_indices = @transform_7, window_bounds = array<i64: 16, 32>}]} {
    %c0 = arith.constant 0 : index
    %c0_0 = arith.constant 0 : index
    %0 = vector.load %arg1[%c0, %c0_0] : memref<16x32xbf16, #tpu.memory_space<vmem>>, vector<16x32xbf16>
    %c0_1 = arith.constant 0 : index
    %c0_2 = arith.constant 0 : index
    %1 = vector.load %arg2[%c0_1, %c0_2] : memref<32x64xbf16, #tpu.memory_space<vmem>>, vector<32x64xbf16>
    %cst = arith.constant dense<0.000000e+00> : vector<16x64xf32>
    %2 = tpu.matmul %0, %1, %cst {dimension_numbers = #tpu.dot_dimension_numbers<[1], [0], [0], [1], [0, 0, 1, 1], [], []>} : vector<16x32xbf16>, vector<32x64xbf16>, vector<16x64xf32> -> vector<16x64xf32>
    %c0_3 = arith.constant 0 : index
    %c0_4 = arith.constant 0 : index
    %3 = vector.load %arg3[%c0_3, %c0_4] : memref<1x64xf32, #tpu.memory_space<vmem>>, vector<1x64xf32>
    %4 = vector.broadcast %3 : vector<1x64xf32> to vector<16x64xf32>
    %5 = arith.addf %2, %4 : vector<16x64xf32>
    %cst_5 = arith.constant 0.000000e+00 : f32
    %6 = vector.broadcast %cst_5 : f32 to vector<16x64xf32>
    %7 = arith.maximumf %5, %6 : vector<16x64xf32>
    %8 = arith.truncf %7 : vector<16x64xf32> to vector<16x64xbf16>
    %c0_6 = arith.constant 0 : index
    %c0_7 = arith.constant 0 : index
    %9 = vector.load %arg4[%c0_6, %c0_7] : memref<64x32xbf16, #tpu.memory_space<vmem>>, vector<64x32xbf16>
    %cst_8 = arith.constant dense<0.000000e+00> : vector<16x32xf32>
    %10 = tpu.matmul %8, %9, %cst_8 {dimension_numbers = #tpu.dot_dimension_numbers<[1], [0], [0], [1], [0, 0, 1, 1], [], []>} : vector<16x64xbf16>, vector<64x32xbf16>, vector<16x32xf32> -> vector<16x32xf32>
    %c0_9 = arith.constant 0 : index
    %c0_10 = arith.constant 0 : index
    %11 = vector.load %arg5[%c0_9, %c0_10] : memref<1x32xf32, #tpu.memory_space<vmem>>, vector<1x32xf32>
    %12 = vector.broadcast %11 : vector<1x32xf32> to vector<16x32xf32>
    %13 = arith.addf %10, %12 : vector<16x32xf32>
    %cst_11 = arith.constant dense<0.000000e+00> : vector<16xf32>
    %14 = vector.multi_reduction <add>, %13, %cst_11 [1] : vector<16x32xf32> to vector<16xf32>
    %15 = vector.shape_cast %14 : vector<16xf32> to vector<16x1xf32>
    %cst_12 = arith.constant 3.200000e+01 : f32
    %16 = vector.broadcast %cst_12 : f32 to vector<16x1xf32>
    %17 = arith.divf %15, %16 : vector<16x1xf32>
    %18 = vector.broadcast %17 : vector<16x1xf32> to vector<16x32xf32>
    %19 = arith.subf %13, %18 : vector<16x32xf32>
    %20 = arith.mulf %19, %19 : vector<16x32xf32>
    %cst_13 = arith.constant dense<0.000000e+00> : vector<16xf32>
    %21 = vector.multi_reduction <add>, %20, %cst_13 [1] : vector<16x32xf32> to vector<16xf32>
    %22 = vector.shape_cast %21 : vector<16xf32> to vector<16x1xf32>
    %cst_14 = arith.constant 3.200000e+01 : f32
    %23 = vector.broadcast %cst_14 : f32 to vector<16x1xf32>
    %24 = arith.divf %22, %23 : vector<16x1xf32>
    %25 = vector.broadcast %17 : vector<16x1xf32> to vector<16x32xf32>
    %26 = arith.subf %13, %25 : vector<16x32xf32>
    %cst_15 = arith.constant 9.99999974E-6 : f32
    %27 = vector.broadcast %cst_15 : f32 to vector<16x1xf32>
    %28 = arith.addf %24, %27 : vector<16x1xf32>
    %29 = math.rsqrt %28 : vector<16x1xf32>
    %30 = vector.broadcast %29 : vector<16x1xf32> to vector<16x32xf32>
    %31 = arith.mulf %26, %30 : vector<16x32xf32>
    %c0_16 = arith.constant 0 : index
    %c0_17 = arith.constant 0 : index
    %32 = vector.load %arg6[%c0_16, %c0_17] : memref<1x32xf32, #tpu.memory_space<vmem>>, vector<1x32xf32>
    %33 = vector.broadcast %32 : vector<1x32xf32> to vector<16x32xf32>
    %34 = arith.mulf %31, %33 : vector<16x32xf32>
    %c0_18 = arith.constant 0 : index
    %c0_19 = arith.constant 0 : index
    %35 = vector.load %arg7[%c0_18, %c0_19] : memref<1x32xf32, #tpu.memory_space<vmem>>, vector<1x32xf32>
    %36 = vector.broadcast %35 : vector<1x32xf32> to vector<16x32xf32>
    %37 = arith.addf %34, %36 : vector<16x32xf32>
    %38 = arith.truncf %37 : vector<16x32xf32> to vector<16x32xbf16>
    %c0_20 = arith.constant 0 : index
    %c0_21 = arith.constant 0 : index
    %39 = vector.load %arg8[%c0_20, %c0_21] : memref<16x32xbf16, #tpu.memory_space<vmem>>, vector<16x32xbf16>
    tpu.vector_store %arg8[%c0_20, %c0_21], %38 {strides = array<i32>} : memref<16x32xbf16, #tpu.memory_space<vmem>>, vector<16x32xbf16>,
    return
  }
  func.func @transform_0(%arg0: i32) -> (i32, i32) {
    %c0_i32 = arith.constant 0 : i32
    %c0_i32_0 = arith.constant 0 : i32
    return %arg0, %c0_i32 : i32, i32
  }
  func.func @transform_1(%arg0: i32) -> (i32, i32) {
    %c0_i32 = arith.constant 0 : i32
    %c0_i32_0 = arith.constant 0 : i32
    %c0_i32_1 = arith.constant 0 : i32
    return %c0_i32, %c0_i32_0 : i32, i32
  }
  func.func @transform_2(%arg0: i32) -> (i32, i32) {
    %c0_i32 = arith.constant 0 : i32
    %c0_i32_0 = arith.constant 0 : i32
    %c0_i32_1 = arith.constant 0 : i32
    return %c0_i32, %c0_i32_0 : i32, i32
  }
  func.func @transform_3(%arg0: i32) -> (i32, i32) {
    %c0_i32 = arith.constant 0 : i32
    %c0_i32_0 = arith.constant 0 : i32
    %c0_i32_1 = arith.constant 0 : i32
    return %c0_i32, %c0_i32_0 : i32, i32
  }
  func.func @transform_4(%arg0: i32) -> (i32, i32) {
    %c0_i32 = arith.constant 0 : i32
    %c0_i32_0 = arith.constant 0 : i32
    %c0_i32_1 = arith.constant 0 : i32
    return %c0_i32, %c0_i32_0 : i32, i32
  }
  func.func @transform_5(%arg0: i32) -> (i32, i32) {
    %c0_i32 = arith.constant 0 : i32
    %c0_i32_0 = arith.constant 0 : i32
    %c0_i32_1 = arith.constant 0 : i32
    return %c0_i32, %c0_i32_0 : i32, i32
  }
  func.func @transform_6(%arg0: i32) -> (i32, i32) {
    %c0_i32 = arith.constant 0 : i32
    %c0_i32_0 = arith.constant 0 : i32
    %c0_i32_1 = arith.constant 0 : i32
    return %c0_i32, %c0_i32_0 : i32, i32
  }
  func.func @transform_7(%arg0: i32) -> (i32, i32) {
    %c0_i32 = arith.constant 0 : i32
    %c0_i32_0 = arith.constant 0 : i32
    return %arg0, %c0_i32 : i32, i32
  }
}

module attributes {stable_mosaic.version = 11 : i64} {
  func.func @_mha_ln_kernel(%arg0: i32, %arg1: memref<1x8x32xbf16, #tpu.memory_space<vmem>>, %arg2: memref<1x8x32xbf16, #tpu.memory_space<vmem>>, %arg3: memref<1x8x8xf32, #tpu.memory_space<vmem>>, %arg4: memref<32x32xbf16, #tpu.memory_space<vmem>>, %arg5: memref<1x32xf32, #tpu.memory_space<vmem>>, %arg6: memref<32x64xbf16, #tpu.memory_space<vmem>>, %arg7: memref<1x64xf32, #tpu.memory_space<vmem>>, %arg8: memref<32x32xbf16, #tpu.memory_space<vmem>>, %arg9: memref<1x32xf32, #tpu.memory_space<vmem>>, %arg10: memref<1x32xf32, #tpu.memory_space<vmem>>, %arg11: memref<1x32xf32, #tpu.memory_space<vmem>>, %arg12: memref<1x8x32xbf16, #tpu.memory_space<vmem>>) attributes {dimension_semantics = [#tpu.dimension_semantics<parallel>], iteration_bounds = array<i64: 2>, scalar_prefetch = 0 : i64, scratch_operands = 0 : i64, tpu.core_type = #tpu.core_type<tc>, window_params = [{transform_indices = @transform_0, window_bounds = array<i64: 1, 8, 32>}, {transform_indices = @transform_1, window_bounds = array<i64: 1, 8, 32>}, {transform_indices = @transform_2, window_bounds = array<i64: 1, 8, 8>}, {pipeline_mode = #tpu.pipeline_mode<synchronous>, transform_indices = @transform_3, window_bounds = array<i64: 32, 32>}, {pipeline_mode = #tpu.pipeline_mode<synchronous>, transform_indices = @transform_4, window_bounds = array<i64: 1, 32>}, {pipeline_mode = #tpu.pipeline_mode<synchronous>, transform_indices = @transform_5, window_bounds = array<i64: 32, 64>}, {pipeline_mode = #tpu.pipeline_mode<synchronous>, transform_indices = @transform_6, window_bounds = array<i64: 1, 64>}, {pipeline_mode = #tpu.pipeline_mode<synchronous>, transform_indices = @transform_7, window_bounds = array<i64: 32, 32>}, {pipeline_mode = #tpu.pipeline_mode<synchronous>, transform_indices = @transform_8, window_bounds = array<i64: 1, 32>}, {pipeline_mode = #tpu.pipeline_mode<synchronous>, transform_indices = @transform_9, window_bounds = array<i64: 1, 32>}, {pipeline_mode = #tpu.pipeline_mode<synchronous>, transform_indices = @transform_10, window_bounds = array<i64: 1, 32>}, {transform_indices = @transform_11, window_bounds = array<i64: 1, 8, 32>}]} {
    %c0 = arith.constant 0 : index
    %c0_0 = arith.constant 0 : index
    %c0_1 = arith.constant 0 : index
    %0 = vector.load %arg1[%c0, %c0_0, %c0_1] : memref<1x8x32xbf16, #tpu.memory_space<vmem>>, vector<1x8x32xbf16>
    %1 = vector.shape_cast %0 : vector<1x8x32xbf16> to vector<8x32xbf16>
    %c0_2 = arith.constant 0 : index
    %c0_3 = arith.constant 0 : index
    %2 = vector.load %arg4[%c0_2, %c0_3] : memref<32x32xbf16, #tpu.memory_space<vmem>>, vector<32x32xbf16>
    %cst = arith.constant dense<0.000000e+00> : vector<8x32xf32>
    %3 = tpu.matmul %1, %2, %cst {dimension_numbers = #tpu.dot_dimension_numbers<[1], [0], [0], [1], [0, 0, 1, 1], [], []>} : vector<8x32xbf16>, vector<32x32xbf16>, vector<8x32xf32> -> vector<8x32xf32>
    %c0_4 = arith.constant 0 : index
    %c0_5 = arith.constant 0 : index
    %4 = vector.load %arg5[%c0_4, %c0_5] : memref<1x32xf32, #tpu.memory_space<vmem>>, vector<1x32xf32>
    %5 = vector.broadcast %4 : vector<1x32xf32> to vector<8x32xf32>
    %6 = arith.addf %3, %5 : vector<8x32xf32>
    %c0_6 = arith.constant 0 : index
    %c0_7 = arith.constant 0 : index
    %c0_8 = arith.constant 0 : index
    %7 = vector.load %arg2[%c0_6, %c0_7, %c0_8] : memref<1x8x32xbf16, #tpu.memory_space<vmem>>, vector<1x8x32xbf16>
    %8 = vector.shape_cast %7 : vector<1x8x32xbf16> to vector<8x32xbf16>
    %c0_9 = arith.constant 0 : index
    %c0_10 = arith.constant 0 : index
    %9 = vector.load %arg6[%c0_9, %c0_10] : memref<32x64xbf16, #tpu.memory_space<vmem>>, vector<32x64xbf16>
    %cst_11 = arith.constant dense<0.000000e+00> : vector<8x64xf32>
    %10 = tpu.matmul %8, %9, %cst_11 {dimension_numbers = #tpu.dot_dimension_numbers<[1], [0], [0], [1], [0, 0, 1, 1], [], []>} : vector<8x32xbf16>, vector<32x64xbf16>, vector<8x64xf32> -> vector<8x64xf32>
    %c0_12 = arith.constant 0 : index
    %c0_13 = arith.constant 0 : index
    %11 = vector.load %arg7[%c0_12, %c0_13] : memref<1x64xf32, #tpu.memory_space<vmem>>, vector<1x64xf32>
    %12 = vector.broadcast %11 : vector<1x64xf32> to vector<8x64xf32>
    %13 = arith.addf %10, %12 : vector<8x64xf32>
    %14 = vector.extract_strided_slice %13 {offsets = [0, 0], sizes = [8, 32], strides = [1, 1]} : vector<8x64xf32> to vector<8x32xf32>
    %15 = vector.extract_strided_slice %13 {offsets = [0, 32], sizes = [8, 32], strides = [1, 1]} : vector<8x64xf32> to vector<8x32xf32>
    %c0_14 = arith.constant 0 : index
    %c0_15 = arith.constant 0 : index
    %c0_16 = arith.constant 0 : index
    %16 = vector.load %arg3[%c0_14, %c0_15, %c0_16] : memref<1x8x8xf32, #tpu.memory_space<vmem>>, vector<1x8x8xf32>
    %17 = vector.shape_cast %16 : vector<1x8x8xf32> to vector<8x8xf32>
    %18 = vector.extract_strided_slice %6 {offsets = [0, 0], sizes = [8, 8], strides = [1, 1]} : vector<8x32xf32> to vector<8x8xf32>
    %19 = arith.truncf %18 : vector<8x8xf32> to vector<8x8xbf16>
    %20 = vector.extract_strided_slice %14 {offsets = [0, 0], sizes = [8, 8], strides = [1, 1]} : vector<8x32xf32> to vector<8x8xf32>
    %21 = arith.truncf %20 : vector<8x8xf32> to vector<8x8xbf16>
    %22 = vector.extract_strided_slice %15 {offsets = [0, 0], sizes = [8, 8], strides = [1, 1]} : vector<8x32xf32> to vector<8x8xf32>
    %23 = arith.truncf %22 : vector<8x8xf32> to vector<8x8xbf16>
    %cst_17 = arith.constant dense<0.000000e+00> : vector<8x8xf32>
    %24 = tpu.matmul %19, %21, %cst_17 {dimension_numbers = #tpu.dot_dimension_numbers<[1], [1], [0], [0], [0, 0, 1, 0], [], []>} : vector<8x8xbf16>, vector<8x8xbf16>, vector<8x8xf32> -> vector<8x8xf32>
    %cst_18 = arith.constant 0.353553385 : f32
    %25 = vector.broadcast %cst_18 : f32 to vector<8x8xf32>
    %26 = arith.mulf %24, %25 : vector<8x8xf32>
    %cst_19 = arith.constant 0.000000e+00 : f32
    %27 = vector.broadcast %cst_19 : f32 to vector<8x8xf32>
    %28 = arith.cmpf oeq, %17, %27 : vector<8x8xf32>
    %cst_20 = arith.constant -1.000000e+09 : f32
    %29 = vector.broadcast %cst_20 : f32 to vector<8x8xf32>
    %30 = arith.select %28, %29, %26 : vector<8x8xi1>, vector<8x8xf32>
    %cst_21 = arith.constant dense<0xFF800000> : vector<8xf32>
    %31 = vector.multi_reduction <maximumf>, %30, %cst_21 [1] : vector<8x8xf32> to vector<8xf32>
    %32 = vector.shape_cast %31 : vector<8xf32> to vector<8x1xf32>
    %33 = vector.broadcast %32 : vector<8x1xf32> to vector<8x8xf32>
    %34 = arith.subf %30, %33 : vector<8x8xf32>
    %35 = math.exp %34 : vector<8x8xf32>
    %cst_22 = arith.constant dense<0.000000e+00> : vector<8xf32>
    %36 = vector.multi_reduction <add>, %35, %cst_22 [1] : vector<8x8xf32> to vector<8xf32>
    %37 = vector.shape_cast %36 : vector<8xf32> to vector<8x1xf32>
    %38 = tpu.reciprocal %37 {approx = true} : vector<8x1xf32> -> vector<8x1xf32>
    %39 = vector.broadcast %38 : vector<8x1xf32> to vector<8x8xf32>
    %40 = arith.mulf %35, %39 : vector<8x8xf32>
    %41 = arith.truncf %40 : vector<8x8xf32> to vector<8x8xbf16>
    %cst_23 = arith.constant dense<0.000000e+00> : vector<8x8xf32>
    %42 = tpu.matmul %41, %23, %cst_23 {dimension_numbers = #tpu.dot_dimension_numbers<[1], [0], [0], [1], [0, 0, 1, 1], [], []>} : vector<8x8xbf16>, vector<8x8xbf16>, vector<8x8xf32> -> vector<8x8xf32>
    %43 = vector.extract_strided_slice %6 {offsets = [0, 8], sizes = [8, 8], strides = [1, 1]} : vector<8x32xf32> to vector<8x8xf32>
    %44 = arith.truncf %43 : vector<8x8xf32> to vector<8x8xbf16>
    %45 = vector.extract_strided_slice %14 {offsets = [0, 8], sizes = [8, 8], strides = [1, 1]} : vector<8x32xf32> to vector<8x8xf32>
    %46 = arith.truncf %45 : vector<8x8xf32> to vector<8x8xbf16>
    %47 = vector.extract_strided_slice %15 {offsets = [0, 8], sizes = [8, 8], strides = [1, 1]} : vector<8x32xf32> to vector<8x8xf32>
    %48 = arith.truncf %47 : vector<8x8xf32> to vector<8x8xbf16>
    %cst_24 = arith.constant dense<0.000000e+00> : vector<8x8xf32>
    %49 = tpu.matmul %44, %46, %cst_24 {dimension_numbers = #tpu.dot_dimension_numbers<[1], [1], [0], [0], [0, 0, 1, 0], [], []>} : vector<8x8xbf16>, vector<8x8xbf16>, vector<8x8xf32> -> vector<8x8xf32>
    %cst_25 = arith.constant 0.353553385 : f32
    %50 = vector.broadcast %cst_25 : f32 to vector<8x8xf32>
    %51 = arith.mulf %49, %50 : vector<8x8xf32>
    %cst_26 = arith.constant 0.000000e+00 : f32
    %52 = vector.broadcast %cst_26 : f32 to vector<8x8xf32>
    %53 = arith.cmpf oeq, %17, %52 : vector<8x8xf32>
    %cst_27 = arith.constant -1.000000e+09 : f32
    %54 = vector.broadcast %cst_27 : f32 to vector<8x8xf32>
    %55 = arith.select %53, %54, %51 : vector<8x8xi1>, vector<8x8xf32>
    %cst_28 = arith.constant dense<0xFF800000> : vector<8xf32>
    %56 = vector.multi_reduction <maximumf>, %55, %cst_28 [1] : vector<8x8xf32> to vector<8xf32>
    %57 = vector.shape_cast %56 : vector<8xf32> to vector<8x1xf32>
    %58 = vector.broadcast %57 : vector<8x1xf32> to vector<8x8xf32>
    %59 = arith.subf %55, %58 : vector<8x8xf32>
    %60 = math.exp %59 : vector<8x8xf32>
    %cst_29 = arith.constant dense<0.000000e+00> : vector<8xf32>
    %61 = vector.multi_reduction <add>, %60, %cst_29 [1] : vector<8x8xf32> to vector<8xf32>
    %62 = vector.shape_cast %61 : vector<8xf32> to vector<8x1xf32>
    %63 = tpu.reciprocal %62 {approx = true} : vector<8x1xf32> -> vector<8x1xf32>
    %64 = vector.broadcast %63 : vector<8x1xf32> to vector<8x8xf32>
    %65 = arith.mulf %60, %64 : vector<8x8xf32>
    %66 = arith.truncf %65 : vector<8x8xf32> to vector<8x8xbf16>
    %cst_30 = arith.constant dense<0.000000e+00> : vector<8x8xf32>
    %67 = tpu.matmul %66, %48, %cst_30 {dimension_numbers = #tpu.dot_dimension_numbers<[1], [0], [0], [1], [0, 0, 1, 1], [], []>} : vector<8x8xbf16>, vector<8x8xbf16>, vector<8x8xf32> -> vector<8x8xf32>
    %68 = vector.extract_strided_slice %6 {offsets = [0, 16], sizes = [8, 8], strides = [1, 1]} : vector<8x32xf32> to vector<8x8xf32>
    %69 = arith.truncf %68 : vector<8x8xf32> to vector<8x8xbf16>
    %70 = vector.extract_strided_slice %14 {offsets = [0, 16], sizes = [8, 8], strides = [1, 1]} : vector<8x32xf32> to vector<8x8xf32>
    %71 = arith.truncf %70 : vector<8x8xf32> to vector<8x8xbf16>
    %72 = vector.extract_strided_slice %15 {offsets = [0, 16], sizes = [8, 8], strides = [1, 1]} : vector<8x32xf32> to vector<8x8xf32>
    %73 = arith.truncf %72 : vector<8x8xf32> to vector<8x8xbf16>
    %cst_31 = arith.constant dense<0.000000e+00> : vector<8x8xf32>
    %74 = tpu.matmul %69, %71, %cst_31 {dimension_numbers = #tpu.dot_dimension_numbers<[1], [1], [0], [0], [0, 0, 1, 0], [], []>} : vector<8x8xbf16>, vector<8x8xbf16>, vector<8x8xf32> -> vector<8x8xf32>
    %cst_32 = arith.constant 0.353553385 : f32
    %75 = vector.broadcast %cst_32 : f32 to vector<8x8xf32>
    %76 = arith.mulf %74, %75 : vector<8x8xf32>
    %cst_33 = arith.constant 0.000000e+00 : f32
    %77 = vector.broadcast %cst_33 : f32 to vector<8x8xf32>
    %78 = arith.cmpf oeq, %17, %77 : vector<8x8xf32>
    %cst_34 = arith.constant -1.000000e+09 : f32
    %79 = vector.broadcast %cst_34 : f32 to vector<8x8xf32>
    %80 = arith.select %78, %79, %76 : vector<8x8xi1>, vector<8x8xf32>
    %cst_35 = arith.constant dense<0xFF800000> : vector<8xf32>
    %81 = vector.multi_reduction <maximumf>, %80, %cst_35 [1] : vector<8x8xf32> to vector<8xf32>
    %82 = vector.shape_cast %81 : vector<8xf32> to vector<8x1xf32>
    %83 = vector.broadcast %82 : vector<8x1xf32> to vector<8x8xf32>
    %84 = arith.subf %80, %83 : vector<8x8xf32>
    %85 = math.exp %84 : vector<8x8xf32>
    %cst_36 = arith.constant dense<0.000000e+00> : vector<8xf32>
    %86 = vector.multi_reduction <add>, %85, %cst_36 [1] : vector<8x8xf32> to vector<8xf32>
    %87 = vector.shape_cast %86 : vector<8xf32> to vector<8x1xf32>
    %88 = tpu.reciprocal %87 {approx = true} : vector<8x1xf32> -> vector<8x1xf32>
    %89 = vector.broadcast %88 : vector<8x1xf32> to vector<8x8xf32>
    %90 = arith.mulf %85, %89 : vector<8x8xf32>
    %91 = arith.truncf %90 : vector<8x8xf32> to vector<8x8xbf16>
    %cst_37 = arith.constant dense<0.000000e+00> : vector<8x8xf32>
    %92 = tpu.matmul %91, %73, %cst_37 {dimension_numbers = #tpu.dot_dimension_numbers<[1], [0], [0], [1], [0, 0, 1, 1], [], []>} : vector<8x8xbf16>, vector<8x8xbf16>, vector<8x8xf32> -> vector<8x8xf32>
    %93 = vector.extract_strided_slice %6 {offsets = [0, 24], sizes = [8, 8], strides = [1, 1]} : vector<8x32xf32> to vector<8x8xf32>
    %94 = arith.truncf %93 : vector<8x8xf32> to vector<8x8xbf16>
    %95 = vector.extract_strided_slice %14 {offsets = [0, 24], sizes = [8, 8], strides = [1, 1]} : vector<8x32xf32> to vector<8x8xf32>
    %96 = arith.truncf %95 : vector<8x8xf32> to vector<8x8xbf16>
    %97 = vector.extract_strided_slice %15 {offsets = [0, 24], sizes = [8, 8], strides = [1, 1]} : vector<8x32xf32> to vector<8x8xf32>
    %98 = arith.truncf %97 : vector<8x8xf32> to vector<8x8xbf16>
    %cst_38 = arith.constant dense<0.000000e+00> : vector<8x8xf32>
    %99 = tpu.matmul %94, %96, %cst_38 {dimension_numbers = #tpu.dot_dimension_numbers<[1], [1], [0], [0], [0, 0, 1, 0], [], []>} : vector<8x8xbf16>, vector<8x8xbf16>, vector<8x8xf32> -> vector<8x8xf32>
    %cst_39 = arith.constant 0.353553385 : f32
    %100 = vector.broadcast %cst_39 : f32 to vector<8x8xf32>
    %101 = arith.mulf %99, %100 : vector<8x8xf32>
    %cst_40 = arith.constant 0.000000e+00 : f32
    %102 = vector.broadcast %cst_40 : f32 to vector<8x8xf32>
    %103 = arith.cmpf oeq, %17, %102 : vector<8x8xf32>
    %cst_41 = arith.constant -1.000000e+09 : f32
    %104 = vector.broadcast %cst_41 : f32 to vector<8x8xf32>
    %105 = arith.select %103, %104, %101 : vector<8x8xi1>, vector<8x8xf32>
    %cst_42 = arith.constant dense<0xFF800000> : vector<8xf32>
    %106 = vector.multi_reduction <maximumf>, %105, %cst_42 [1] : vector<8x8xf32> to vector<8xf32>
    %107 = vector.shape_cast %106 : vector<8xf32> to vector<8x1xf32>
    %108 = vector.broadcast %107 : vector<8x1xf32> to vector<8x8xf32>
    %109 = arith.subf %105, %108 : vector<8x8xf32>
    %110 = math.exp %109 : vector<8x8xf32>
    %cst_43 = arith.constant dense<0.000000e+00> : vector<8xf32>
    %111 = vector.multi_reduction <add>, %110, %cst_43 [1] : vector<8x8xf32> to vector<8xf32>
    %112 = vector.shape_cast %111 : vector<8xf32> to vector<8x1xf32>
    %113 = tpu.reciprocal %112 {approx = true} : vector<8x1xf32> -> vector<8x1xf32>
    %114 = vector.broadcast %113 : vector<8x1xf32> to vector<8x8xf32>
    %115 = arith.mulf %110, %114 : vector<8x8xf32>
    %116 = arith.truncf %115 : vector<8x8xf32> to vector<8x8xbf16>
    %cst_44 = arith.constant dense<0.000000e+00> : vector<8x8xf32>
    %117 = tpu.matmul %116, %98, %cst_44 {dimension_numbers = #tpu.dot_dimension_numbers<[1], [0], [0], [1], [0, 0, 1, 1], [], []>} : vector<8x8xbf16>, vector<8x8xbf16>, vector<8x8xf32> -> vector<8x8xf32>
    %118 = tpu.concatenate %42, %67, %92, %117 in 1 : vector<8x8xf32>, vector<8x8xf32>, vector<8x8xf32>, vector<8x8xf32> -> vector<8x32xf32>
    %119 = arith.truncf %118 : vector<8x32xf32> to vector<8x32xbf16>
    %c0_45 = arith.constant 0 : index
    %c0_46 = arith.constant 0 : index
    %120 = vector.load %arg8[%c0_45, %c0_46] : memref<32x32xbf16, #tpu.memory_space<vmem>>, vector<32x32xbf16>
    %cst_47 = arith.constant dense<0.000000e+00> : vector<8x32xf32>
    %121 = tpu.matmul %119, %120, %cst_47 {dimension_numbers = #tpu.dot_dimension_numbers<[1], [0], [0], [1], [0, 0, 1, 1], [], []>} : vector<8x32xbf16>, vector<32x32xbf16>, vector<8x32xf32> -> vector<8x32xf32>
    %c0_48 = arith.constant 0 : index
    %c0_49 = arith.constant 0 : index
    %122 = vector.load %arg9[%c0_48, %c0_49] : memref<1x32xf32, #tpu.memory_space<vmem>>, vector<1x32xf32>
    %123 = vector.broadcast %122 : vector<1x32xf32> to vector<8x32xf32>
    %124 = arith.addf %121, %123 : vector<8x32xf32>
    %cst_50 = arith.constant dense<0.000000e+00> : vector<8xf32>
    %125 = vector.multi_reduction <add>, %124, %cst_50 [1] : vector<8x32xf32> to vector<8xf32>
    %126 = vector.shape_cast %125 : vector<8xf32> to vector<8x1xf32>
    %cst_51 = arith.constant 3.200000e+01 : f32
    %127 = vector.broadcast %cst_51 : f32 to vector<8x1xf32>
    %128 = arith.divf %126, %127 : vector<8x1xf32>
    %129 = vector.broadcast %128 : vector<8x1xf32> to vector<8x32xf32>
    %130 = arith.subf %124, %129 : vector<8x32xf32>
    %131 = arith.mulf %130, %130 : vector<8x32xf32>
    %cst_52 = arith.constant dense<0.000000e+00> : vector<8xf32>
    %132 = vector.multi_reduction <add>, %131, %cst_52 [1] : vector<8x32xf32> to vector<8xf32>
    %133 = vector.shape_cast %132 : vector<8xf32> to vector<8x1xf32>
    %cst_53 = arith.constant 3.200000e+01 : f32
    %134 = vector.broadcast %cst_53 : f32 to vector<8x1xf32>
    %135 = arith.divf %133, %134 : vector<8x1xf32>
    %136 = vector.broadcast %128 : vector<8x1xf32> to vector<8x32xf32>
    %137 = arith.subf %124, %136 : vector<8x32xf32>
    %cst_54 = arith.constant 9.99999974E-6 : f32
    %138 = vector.broadcast %cst_54 : f32 to vector<8x1xf32>
    %139 = arith.addf %135, %138 : vector<8x1xf32>
    %140 = math.rsqrt %139 : vector<8x1xf32>
    %141 = vector.broadcast %140 : vector<8x1xf32> to vector<8x32xf32>
    %142 = arith.mulf %137, %141 : vector<8x32xf32>
    %c0_55 = arith.constant 0 : index
    %c0_56 = arith.constant 0 : index
    %143 = vector.load %arg10[%c0_55, %c0_56] : memref<1x32xf32, #tpu.memory_space<vmem>>, vector<1x32xf32>
    %144 = vector.broadcast %143 : vector<1x32xf32> to vector<8x32xf32>
    %145 = arith.mulf %142, %144 : vector<8x32xf32>
    %c0_57 = arith.constant 0 : index
    %c0_58 = arith.constant 0 : index
    %146 = vector.load %arg11[%c0_57, %c0_58] : memref<1x32xf32, #tpu.memory_space<vmem>>, vector<1x32xf32>
    %147 = vector.broadcast %146 : vector<1x32xf32> to vector<8x32xf32>
    %148 = arith.addf %145, %147 : vector<8x32xf32>
    %149 = arith.truncf %148 : vector<8x32xf32> to vector<8x32xbf16>
    %c0_59 = arith.constant 0 : index
    %c0_60 = arith.constant 0 : index
    %c0_61 = arith.constant 0 : index
    %150 = vector.load %arg12[%c0_59, %c0_60, %c0_61] : memref<1x8x32xbf16, #tpu.memory_space<vmem>>, vector<1x8x32xbf16>
    %151 = vector.shape_cast %150 : vector<1x8x32xbf16> to vector<8x32xbf16>
    %152 = vector.shape_cast %149 : vector<8x32xbf16> to vector<1x8x32xbf16>
    tpu.vector_store %arg12[%c0_59, %c0_60, %c0_61], %152 {strides = array<i32>} : memref<1x8x32xbf16, #tpu.memory_space<vmem>>, vector<1x8x32xbf16>,
    return
  }
  func.func @transform_0(%arg0: i32) -> (i32, i32, i32) {
    %c0_i32 = arith.constant 0 : i32
    %c0_i32_0 = arith.constant 0 : i32
    %c0_i32_1 = arith.constant 0 : i32
    return %arg0, %c0_i32, %c0_i32_0 : i32, i32, i32
  }
  func.func @transform_1(%arg0: i32) -> (i32, i32, i32) {
    %c0_i32 = arith.constant 0 : i32
    %c0_i32_0 = arith.constant 0 : i32
    %c0_i32_1 = arith.constant 0 : i32
    return %arg0, %c0_i32, %c0_i32_0 : i32, i32, i32
  }
  func.func @transform_2(%arg0: i32) -> (i32, i32, i32) {
    %c0_i32 = arith.constant 0 : i32
    %c0_i32_0 = arith.constant 0 : i32
    %c0_i32_1 = arith.constant 0 : i32
    return %arg0, %c0_i32, %c0_i32_0 : i32, i32, i32
  }
  func.func @transform_3(%arg0: i32) -> (i32, i32) {
    %c0_i32 = arith.constant 0 : i32
    %c0_i32_0 = arith.constant 0 : i32
    %c0_i32_1 = arith.constant 0 : i32
    return %c0_i32, %c0_i32_0 : i32, i32
  }
  func.func @transform_4(%arg0: i32) -> (i32, i32) {
    %c0_i32 = arith.constant 0 : i32
    %c0_i32_0 = arith.constant 0 : i32
    %c0_i32_1 = arith.constant 0 : i32
    return %c0_i32, %c0_i32_0 : i32, i32
  }
  func.func @transform_5(%arg0: i32) -> (i32, i32) {
    %c0_i32 = arith.constant 0 : i32
    %c0_i32_0 = arith.constant 0 : i32
    %c0_i32_1 = arith.constant 0 : i32
    return %c0_i32, %c0_i32_0 : i32, i32
  }
  func.func @transform_6(%arg0: i32) -> (i32, i32) {
    %c0_i32 = arith.constant 0 : i32
    %c0_i32_0 = arith.constant 0 : i32
    %c0_i32_1 = arith.constant 0 : i32
    return %c0_i32, %c0_i32_0 : i32, i32
  }
  func.func @transform_7(%arg0: i32) -> (i32, i32) {
    %c0_i32 = arith.constant 0 : i32
    %c0_i32_0 = arith.constant 0 : i32
    %c0_i32_1 = arith.constant 0 : i32
    return %c0_i32, %c0_i32_0 : i32, i32
  }
  func.func @transform_8(%arg0: i32) -> (i32, i32) {
    %c0_i32 = arith.constant 0 : i32
    %c0_i32_0 = arith.constant 0 : i32
    %c0_i32_1 = arith.constant 0 : i32
    return %c0_i32, %c0_i32_0 : i32, i32
  }
  func.func @transform_9(%arg0: i32) -> (i32, i32) {
    %c0_i32 = arith.constant 0 : i32
    %c0_i32_0 = arith.constant 0 : i32
    %c0_i32_1 = arith.constant 0 : i32
    return %c0_i32, %c0_i32_0 : i32, i32
  }
  func.func @transform_10(%arg0: i32) -> (i32, i32) {
    %c0_i32 = arith.constant 0 : i32
    %c0_i32_0 = arith.constant 0 : i32
    %c0_i32_1 = arith.constant 0 : i32
    return %c0_i32, %c0_i32_0 : i32, i32
  }
  func.func @transform_11(%arg0: i32) -> (i32, i32, i32) {
    %c0_i32 = arith.constant 0 : i32
    %c0_i32_0 = arith.constant 0 : i32
    %c0_i32_1 = arith.constant 0 : i32
    return %arg0, %c0_i32, %c0_i32_0 : i32, i32, i32
  }
}

module attributes {stable_mosaic.version = 11 : i64} {
  func.func @_vocab_softmax_kernel(%arg0: i32, %arg1: i32, %arg2: i32, %arg3: memref<16x32xbf16, #tpu.memory_space<vmem>>, %arg4: memref<32x16xbf16, #tpu.memory_space<vmem>>, %arg5: memref<1x16xf32, #tpu.memory_space<vmem>>, %arg6: memref<16x16xf32, #tpu.memory_space<vmem>>, %arg7: memref<16x1xf32, #tpu.memory_space<vmem>>, %arg8: memref<16x1xf32, #tpu.memory_space<vmem>>) attributes {dimension_semantics = [#tpu.dimension_semantics<parallel>, #tpu.dimension_semantics<arbitrary>, #tpu.dimension_semantics<arbitrary>], iteration_bounds = array<i64: 1, 2, 1>, scalar_prefetch = 0 : i64, scratch_operands = 2 : i64, tpu.core_type = #tpu.core_type<tc>, window_params = [{transform_indices = @transform_0, window_bounds = array<i64: 16, 32>}, {transform_indices = @transform_1, window_bounds = array<i64: 32, 16>}, {transform_indices = @transform_2, window_bounds = array<i64: 1, 16>}, {transform_indices = @transform_3, window_bounds = array<i64: 16, 16>}]} {
    %c0 = arith.constant 0 : index
    %c0_0 = arith.constant 0 : index
    %0 = vector.load %arg3[%c0, %c0_0] : memref<16x32xbf16, #tpu.memory_space<vmem>>, vector<16x32xbf16>
    %c0_1 = arith.constant 0 : index
    %c0_2 = arith.constant 0 : index
    %1 = vector.load %arg4[%c0_1, %c0_2] : memref<32x16xbf16, #tpu.memory_space<vmem>>, vector<32x16xbf16>
    %cst = arith.constant dense<0.000000e+00> : vector<16x16xf32>
    %2 = tpu.matmul %0, %1, %cst {dimension_numbers = #tpu.dot_dimension_numbers<[1], [0], [0], [1], [0, 0, 1, 1], [], []>} : vector<16x32xbf16>, vector<32x16xbf16>, vector<16x16xf32> -> vector<16x16xf32>
    %c0_3 = arith.constant 0 : index
    %c0_4 = arith.constant 0 : index
    %3 = vector.load %arg5[%c0_3, %c0_4] : memref<1x16xf32, #tpu.memory_space<vmem>>, vector<1x16xf32>
    %4 = vector.broadcast %3 : vector<1x16xf32> to vector<16x16xf32>
    %5 = arith.addf %2, %4 : vector<16x16xf32>
    %c0_i32 = arith.constant 0 : i32
    %6 = arith.cmpi eq, %arg1, %c0_i32 : i32
    %c0_i32_5 = arith.constant 0 : i32
    %7 = arith.cmpi eq, %arg2, %c0_i32_5 : i32
    %8 = arith.andi %6, %7 : i1
    %9 = arith.extui %8 : i1 to i32
    %c0_i32_6 = arith.constant 0 : i32
    %10 = arith.cmpi ne, %9, %c0_i32_6 : i32
    scf.if %10 {
      %cst_10 = arith.constant 0xFF800000 : f32
      %17 = vector.broadcast %cst_10 : f32 to vector<16x1xf32>
      %c0_11 = arith.constant 0 : index
      %c0_12 = arith.constant 0 : index
      %18 = vector.load %arg7[%c0_11, %c0_12] : memref<16x1xf32, #tpu.memory_space<vmem>>, vector<16x1xf32>
      tpu.vector_store %arg7[%c0_11, %c0_12], %17 {strides = array<i32>} : memref<16x1xf32, #tpu.memory_space<vmem>>, vector<16x1xf32>,
      %cst_13 = arith.constant 0.000000e+00 : f32
      %19 = vector.broadcast %cst_13 : f32 to vector<16x1xf32>
      %c0_14 = arith.constant 0 : index
      %c0_15 = arith.constant 0 : index
      %20 = vector.load %arg8[%c0_14, %c0_15] : memref<16x1xf32, #tpu.memory_space<vmem>>, vector<16x1xf32>
      tpu.vector_store %arg8[%c0_14, %c0_15], %19 {strides = array<i32>} : memref<16x1xf32, #tpu.memory_space<vmem>>, vector<16x1xf32>,
    } else {
    }
    %c0_i32_7 = arith.constant 0 : i32
    %11 = arith.cmpi eq, %arg1, %c0_i32_7 : i32
    %12 = arith.extui %11 : i1 to i32
    %c0_i32_8 = arith.constant 0 : i32
    %13 = arith.cmpi ne, %12, %c0_i32_8 : i32
    scf.if %13 {
      %c0_10 = arith.constant 0 : index
      %c0_11 = arith.constant 0 : index
      %17 = vector.load %arg7[%c0_10, %c0_11] : memref<16x1xf32, #tpu.memory_space<vmem>>, vector<16x1xf32>
      %cst_12 = arith.constant dense<0xFF800000> : vector<16xf32>
      %18 = vector.multi_reduction <maximumf>, %5, %cst_12 [1] : vector<16x16xf32> to vector<16xf32>
      %19 = vector.shape_cast %18 : vector<16xf32> to vector<16x1xf32>
      %20 = arith.maximumf %17, %19 : vector<16x1xf32>
      %c0_13 = arith.constant 0 : index
      %c0_14 = arith.constant 0 : index
      %21 = vector.load %arg8[%c0_13, %c0_14] : memref<16x1xf32, #tpu.memory_space<vmem>>, vector<16x1xf32>
      %22 = arith.subf %17, %20 : vector<16x1xf32>
      %23 = math.exp %22 : vector<16x1xf32>
      %24 = arith.mulf %21, %23 : vector<16x1xf32>
      %25 = vector.broadcast %20 : vector<16x1xf32> to vector<16x16xf32>
      %26 = arith.subf %5, %25 : vector<16x16xf32>
      %27 = math.exp %26 : vector<16x16xf32>
      %cst_15 = arith.constant dense<0.000000e+00> : vector<16xf32>
      %28 = vector.multi_reduction <add>, %27, %cst_15 [1] : vector<16x16xf32> to vector<16xf32>
      %29 = vector.shape_cast %28 : vector<16xf32> to vector<16x1xf32>
      %30 = arith.addf %24, %29 : vector<16x1xf32>
      %c0_16 = arith.constant 0 : index
      %c0_17 = arith.constant 0 : index
      %31 = vector.load %arg8[%c0_16, %c0_17] : memref<16x1xf32, #tpu.memory_space<vmem>>, vector<16x1xf32>
      tpu.vector_store %arg8[%c0_16, %c0_17], %30 {strides = array<i32>} : memref<16x1xf32, #tpu.memory_space<vmem>>, vector<16x1xf32>,
      %c0_18 = arith.constant 0 : index
      %c0_19 = arith.constant 0 : index
      %32 = vector.load %arg7[%c0_18, %c0_19] : memref<16x1xf32, #tpu.memory_space<vmem>>, vector<16x1xf32>
      tpu.vector_store %arg7[%c0_18, %c0_19], %20 {strides = array<i32>} : memref<16x1xf32, #tpu.memory_space<vmem>>, vector<16x1xf32>,
      %c0_20 = arith.constant 0 : index
      %c0_21 = arith.constant 0 : index
      %33 = vector.load %arg6[%c0_20, %c0_21] : memref<16x16xf32, #tpu.memory_space<vmem>>, vector<16x16xf32>
      tpu.vector_store %arg6[%c0_20, %c0_21], %5 {strides = array<i32>} : memref<16x16xf32, #tpu.memory_space<vmem>>, vector<16x16xf32>,
    } else {
    }
    %c1_i32 = arith.constant 1 : i32
    %14 = arith.cmpi eq, %arg1, %c1_i32 : i32
    %15 = arith.extui %14 : i1 to i32
    %c0_i32_9 = arith.constant 0 : i32
    %16 = arith.cmpi ne, %15, %c0_i32_9 : i32
    scf.if %16 {
      %c0_10 = arith.constant 0 : index
      %c0_11 = arith.constant 0 : index
      %17 = vector.load %arg7[%c0_10, %c0_11] : memref<16x1xf32, #tpu.memory_space<vmem>>, vector<16x1xf32>
      %18 = vector.broadcast %17 : vector<16x1xf32> to vector<16x16xf32>
      %19 = arith.subf %5, %18 : vector<16x16xf32>
      %20 = math.exp %19 : vector<16x16xf32>
      %c0_12 = arith.constant 0 : index
      %c0_13 = arith.constant 0 : index
      %21 = vector.load %arg8[%c0_12, %c0_13] : memref<16x1xf32, #tpu.memory_space<vmem>>, vector<16x1xf32>
      %22 = vector.broadcast %21 : vector<16x1xf32> to vector<16x16xf32>
      %23 = arith.divf %20, %22 : vector<16x16xf32>
      %c0_14 = arith.constant 0 : index
      %c0_15 = arith.constant 0 : index
      %24 = vector.load %arg6[%c0_14, %c0_15] : memref<16x16xf32, #tpu.memory_space<vmem>>, vector<16x16xf32>
      tpu.vector_store %arg6[%c0_14, %c0_15], %23 {strides = array<i32>} : memref<16x16xf32, #tpu.memory_space<vmem>>, vector<16x16xf32>,
    } else {
    }
    return
  }
  func.func @transform_0(%arg0: i32, %arg1: i32, %arg2: i32) -> (i32, i32) {
    %c0_i32 = arith.constant 0 : i32
    %c0_i32_0 = arith.constant 0 : i32
    return %arg0, %c0_i32 : i32, i32
  }
  func.func @transform_1(%arg0: i32, %arg1: i32, %arg2: i32) -> (i32, i32) {
    %c0_i32 = arith.constant 0 : i32
    %c0_i32_0 = arith.constant 0 : i32
    return %c0_i32, %arg2 : i32, i32
  }
  func.func @transform_2(%arg0: i32, %arg1: i32, %arg2: i32) -> (i32, i32) {
    %c0_i32 = arith.constant 0 : i32
    %c0_i32_0 = arith.constant 0 : i32
    return %c0_i32, %arg2 : i32, i32
  }
  func.func @transform_3(%arg0: i32, %arg1: i32, %arg2: i32) -> (i32, i32) {
    %c0_i32 = arith.constant 0 : i32
    return %arg0, %arg2 : i32, i32
  }
}

</mosaic_0001>

<llo_original>
// kernel: decoder_forward.6
$region0: #{decoder_forward.6}
  #allocation0 [shape = 'u32[]', space=smem, size = 0x4, offset = 0x4, fixed_abs, tag = 'smem constant byte address 0x4 - core index']
  #allocation1 [shape = 'u32[144,128]{1,0:T(1,128)}', space=vmem, size = 0x12000, scoped, tag = 'internal scratch']
  %s0 = inlined_call_operand.vmem [shape: bf16[16,32], index: 0, kind: input, shape index: {}]
  %s1 = inlined_call_operand.vmem [shape: bf16[32,64], index: 1, kind: input, shape index: {}]
  %s2 = inlined_call_operand.vmem [shape: f32[1,64], index: 2, kind: input, shape index: {}]
  %s3 = inlined_call_operand.vmem [shape: bf16[64,32], index: 3, kind: input, shape index: {}]
  %s4 = inlined_call_operand.vmem [shape: f32[1,32], index: 4, kind: input, shape index: {}]
  %s5 = inlined_call_operand.vmem [shape: f32[1,32], index: 5, kind: input, shape index: {}]
  %s6 = inlined_call_operand.vmem [shape: f32[1,32], index: 6, kind: input, shape index: {}]
  %s7 = inlined_call_operand.vmem [shape: bf16[16,32], index: 7, kind: output, shape index: {}]
  %s8 = sld [smem:[#allocation0]]
  $region38: #{decoder_forward.6} parent=0
    _
  %s10 = ssub.s32 1, %s8
  %s11 = scalar_select 0, %s10, %s8
  // Predicated region
  $region2: #{decoder_forward.6} parent=0 // pred_check
    _
  $region3: #{decoder_forward.6} parent=0 // pred_check_branch
    %13 = sbr.rel (0) target = $region5
  $region4: #{decoder_forward.6} parent=0 // pred_region
    _
  $region5: #{decoder_forward.6} parent=0 // pred_fallthru
    _
  // Predicated region
  $region6: #{decoder_forward.6} parent=0 // pred_check
    _
  $region7: #{decoder_forward.6} parent=0 // pred_check_branch
    %15 = sbr.rel (0) target = $region9
  $region8: #{decoder_forward.6} parent=0 // pred_region
    _
  $region9: #{decoder_forward.6} parent=0 // pred_fallthru
    _
  // Predicated region
  $region10: #{decoder_forward.6} parent=0 // pred_check
    _
  $region11: #{decoder_forward.6} parent=0 // pred_check_branch
    %17 = sbr.rel (0) target = $region13
  $region12: #{decoder_forward.6} parent=0 // pred_region
    _
  $region13: #{decoder_forward.6} parent=0 // pred_fallthru
    _
  // Predicated region
  $region14: #{decoder_forward.6} parent=0 // pred_check
    _
  $region15: #{decoder_forward.6} parent=0 // pred_check_branch
    %19 = sbr.rel (0) target = $region17
  $region16: #{decoder_forward.6} parent=0 // pred_region
    _
  $region17: #{decoder_forward.6} parent=0 // pred_fallthru
    _
  // Predicated region
  $region18: #{decoder_forward.6} parent=0 // pred_check
    _
  $region19: #{decoder_forward.6} parent=0 // pred_check_branch
    %21 = sbr.rel (0) target = $region21
  $region20: #{decoder_forward.6} parent=0 // pred_region
    _
  $region21: #{decoder_forward.6} parent=0 // pred_fallthru
    _
  // Predicated region
  $region22: #{decoder_forward.6} parent=0 // pred_check
    _
  $region23: #{decoder_forward.6} parent=0 // pred_check_branch
    %23 = sbr.rel (0) target = $region25
  $region24: #{decoder_forward.6} parent=0 // pred_region
    _
  $region25: #{decoder_forward.6} parent=0 // pred_fallthru
    _
  // Predicated region
  $region26: #{decoder_forward.6} parent=0 // pred_check
    _
  $region27: #{decoder_forward.6} parent=0 // pred_check_branch
    %25 = sbr.rel (0) target = $region29
  $region28: #{decoder_forward.6} parent=0 // pred_region
    _
  $region29: #{decoder_forward.6} parent=0 // pred_fallthru
    _
  %v27 = vld [vmem:[%s0] sm:$0xf]
  %v28 = vld [vmem:[%s0 + $0x4] sm:$0xf]
  %v29 = vld [vmem:[%s1] sm:$0xf]
  %v30 = vld [vmem:[%s1 + $0x4] sm:$0xf]
  %v31 = vld [vmem:[%s1 + $0x8] sm:$0xf]
  %v32 = vld [vmem:[%s1 + $0xc] sm:$0xf]
  %v33 = vld [vmem:[%s2] sm:$0x1]
  %v35 = vlaneseq
  %v36 = vshrl.u32 %v35, 7
  %v37 = vsub.s32 0, %v36
  %v38 = vrot.slane %v33, %v37
  %v42 = vunpack.c.l.b16 %v27
  %v43 = vunpack.c.l.b16 %v28
  %v44 = vpack.c.b16 %v43, %v42
  %v49 = vunpack.c.l.b16 %v29
  %v50 = vunpack.c.l.b16 %v30
  %v51 = vunpack.c.l.b16 %v31
  %v52 = vunpack.c.l.b16 %v32
  %v53 = vpack.c.b16 %v50, %v49
  %v54 = vpack.c.b16 %v52, %v51
  %vm57 = vcmask 261120
  %v59 = vsel %vm57, %v44, 0
  %61 = vmatprep.subr.bf16.mxu0 0
  %62 = vmatpush1.bf16.msra.mxu0 %v53
  %63 = vmatprep.subr.bf16.mxu0 0
  %64 = vmatpush1.bf16.msra.mxu0 %v54
  %65 = vmatprep.subr.bf16.mxu0 0
  %66 = vmatpush1.bf16.msra.mxu0 0
  %67 = vmatprep.subr.bf16.mxu0 0
  %68 = vmatpush1.bf16.msra.mxu0 0
  %69 = vmatprep.subr.bf16.mxu0 0
  %70 = vmatpush1.bf16.msra.mxu0 0
  %71 = vmatprep.subr.bf16.mxu0 0
  %72 = vmatpush1.bf16.msra.mxu0 0
  %73 = vmatprep.subr.bf16.mxu0 0
  %74 = vmatpush1.bf16.msra.mxu0 0
  %75 = vmatprep.subr.bf16.mxu0 0
  %76 = vmatpush1.bf16.msra.mxu0 0
  %77 = vmatprep.subr.bf16.mxu0 0
  %78 = vmatpush1.bf16.msra.mxu0 0
  %79 = vmatprep.subr.bf16.mxu0 0
  %80 = vmatpush1.bf16.msra.mxu0 0
  %81 = vmatprep.subr.bf16.mxu0 0
  %82 = vmatpush1.bf16.msra.mxu0 0
  %83 = vmatprep.subr.bf16.mxu0 0
  %84 = vmatpush1.bf16.msra.mxu0 0
  %85 = vmatprep.subr.bf16.mxu0 0
  %86 = vmatpush1.bf16.msra.mxu0 0
  %87 = vmatprep.subr.bf16.mxu0 0
  %88 = vmatpush1.bf16.msra.mxu0 0
  %89 = vmatprep.subr.bf16.mxu0 0
  %90 = vmatpush1.bf16.msra.mxu0 0
  %91 = vmatprep.subr.bf16.mxu0 0
  %92 = vmatpush1.bf16.msra.mxu0 0
  %93 = vmatprep.mubr.bf16.mxu0 0
  %94 = vmatmul.mubr.bf16.gmra.mrb[0].mxu0 %v59
  %v95 = vpop.f32.mrb[0].mxu0
  %v96 = vadd.f32 %v38, %v95
  %v97 = vpop.f32.mrb[0].mxu0
  %v98 = vpop.f32.mrb[0].mxu0
  %v99 = vadd.f32 %v38, %v98
  %v100 = vpop.f32.mrb[0].mxu0
  %101 = vdwg.mxu0
  %v102 = vmax.f32 %v96, 0.0
  %v103 = vmax.f32 %v99, 0.0
  %v104 = vpack.c.bf16 %v103, %v102
  %v105 = vld [vmem:[%s3] sm:$0xf]
  %v106 = vld [vmem:[%s3 + $0x4] sm:$0xf]
  %v107 = vld [vmem:[%s3 + $0x8] sm:$0xf]
  %v108 = vld [vmem:[%s3 + $0xc] sm:$0xf]
  %v109 = vld [vmem:[%s3 + $0x10] sm:$0xf]
  %v110 = vld [vmem:[%s3 + $0x14] sm:$0xf]
  %v111 = vld [vmem:[%s3 + $0x18] sm:$0xf]
  %v112 = vld [vmem:[%s3 + $0x1c] sm:$0xf]
  %v113 = vld [vmem:[%s4] sm:$0x1]
  %v115 = vlaneseq
  %v116 = vshrl.u32 %v115, 7
  %v117 = vsub.s32 0, %v116
  %v118 = vrot.slane %v113, %v117
  %v128 = vunpack.c.l.b16 %v105
  %v129 = vunpack.c.l.b16 %v106
  %v130 = vunpack.c.l.b16 %v107
  %v131 = vunpack.c.l.b16 %v108
  %v132 = vunpack.c.l.b16 %v109
  %v133 = vunpack.c.l.b16 %v110
  %v134 = vunpack.c.l.b16 %v111
  %v135 = vunpack.c.l.b16 %v112
  %v136 = vpack.c.b16 %v129, %v128
  %v137 = vpack.c.b16 %v131, %v130
  %v138 = vpack.c.b16 %v133, %v132
  %v139 = vpack.c.b16 %v135, %v134
  %vm144 = vcmask 523264
  %v146 = vsel %vm144, %v104, 0
  %148 = vmatprep.subr.bf16.mxu0 0
  %149 = vmatpush1.bf16.msra.mxu0 %v136
  %150 = vmatprep.subr.bf16.mxu0 0
  %151 = vmatpush1.bf16.msra.mxu0 %v137
  %152 = vmatprep.subr.bf16.mxu0 0
  %153 = vmatpush1.bf16.msra.mxu0 %v138
  %154 = vmatprep.subr.bf16.mxu0 0
  %155 = vmatpush1.bf16.msra.mxu0 %v139
  %156 = vmatprep.subr.bf16.mxu0 0
  %157 = vmatpush1.bf16.msra.mxu0 0
  %158 = vmatprep.subr.bf16.mxu0 0
  %159 = vmatpush1.bf16.msra.mxu0 0
  %160 = vmatprep.subr.bf16.mxu0 0
  %161 = vmatpush1.bf16.msra.mxu0 0
  %162 = vmatprep.subr.bf16.mxu0 0
  %163 = vmatpush1.bf16.msra.mxu0 0
  %164 = vmatprep.subr.bf16.mxu0 0
  %165 = vmatpush1.bf16.msra.mxu0 0
  %166 = vmatprep.subr.bf16.mxu0 0
  %167 = vmatpush1.bf16.msra.mxu0 0
  %168 = vmatprep.subr.bf16.mxu0 0
  %169 = vmatpush1.bf16.msra.mxu0 0
  %170 = vmatprep.subr.bf16.mxu0 0
  %171 = vmatpush1.bf16.msra.mxu0 0
  %172 = vmatprep.subr.bf16.mxu0 0
  %173 = vmatpush1.bf16.msra.mxu0 0
  %174 = vmatprep.subr.bf16.mxu0 0
  %175 = vmatpush1.bf16.msra.mxu0 0
  %176 = vmatprep.subr.bf16.mxu0 0
  %177 = vmatpush1.bf16.msra.mxu0 0
  %178 = vmatprep.subr.bf16.mxu0 0
  %179 = vmatpush1.bf16.msra.mxu0 0
  %180 = vmatprep.mubr.bf16.mxu0 0
  %181 = vmatmul.mubr.bf16.gmra.mrb[0].mxu0 %v146
  %v182 = vpop.f32.mrb[0].mxu0
  %v183 = vadd.f32 %v118, %v182
  %v184 = vpop.f32.mrb[0].mxu0
  %v185 = vpop.f32.mrb[0].mxu0
  %v186 = vadd.f32 %v118, %v185
  %v187 = vpop.f32.mrb[0].mxu0
  %188 = vdwg.mxu0
  %v189 = vsel %vm57, %v183, 0.0
  %190 = vadd.xlane.f32.xlu0 %v189
  %v191 = vpop.xlane.xlu0 %190
  %v192 = vsel %vm57, %v186, 0.0
  %193 = vadd.xlane.f32.xlu0 %v192
  %v194 = vpop.xlane.xlu0 %193
  %v195 = vrcp.pop 32.0
  %v196 = vmul.f32 %v191, %v195
  %v197 = vmul.f32 %v194, %v195
  %v198 = vsub.f32 %v183, %v196
  %v199 = vsub.f32 %v186, %v197
  %v200 = vmul.f32 %v198, %v198
  %v201 = vmul.f32 %v199, %v199
  %v202 = vsel %vm57, %v200, 0.0
  %203 = vadd.xlane.f32.xlu0 %v202
  %v204 = vpop.xlane.xlu0 %203
  %v205 = vsel %vm57, %v201, 0.0
  %206 = vadd.xlane.f32.xlu0 %v205
  %v207 = vpop.xlane.xlu0 %206
  %v208 = vmul.f32 %v204, %v195
  %v209 = vmul.f32 %v207, %v195
  %v210 = vadd.f32 %v208, 1e-05
  %v211 = vadd.f32 %v209, 1e-05
  %v212 = vrsqrt.pop %v210
  %v213 = vrsqrt.pop %v211
  %v214 = vmul.f32 %v198, %v212
  %v215 = vmul.f32 %v199, %v213
  %v216 = vld [vmem:[%s5] sm:$0x1]
  %v218 = vlaneseq
  %v219 = vshrl.u32 %v218, 7
  %v220 = vsub.s32 0, %v219
  %v221 = vrot.slane %v216, %v220
  %v223 = vmul.f32 %v214, %v221
  %v224 = vmul.f32 %v215, %v221
  %v225 = vld [vmem:[%s6] sm:$0x1]
  %v227 = vlaneseq
  %v228 = vshrl.u32 %v227, 7
  %v229 = vsub.s32 0, %v228
  %v230 = vrot.slane %v225, %v229
  %v232 = vadd.f32 %v223, %v230
  %v233 = vadd.f32 %v224, %v230
  %v234 = vpack.c.bf16 %v233, %v232
  %v236 = vunpack.c.l.b16 %v234
  %v237 = vunpack.c.h.b16 %v234
  %v238 = vpack.c.b16 %v236, %v236
  %v239 = vpack.c.b16 %v237, %v237
  %vm242 = vcmask 257024
  %243 = vst.msk [vmem:[%s7] sm:$0xf] %vm242, %v238
  %244 = vst.msk [vmem:[%s7 + $0x4] sm:$0xf] %vm242, %v239
  // Predicated region
  $region30: #{decoder_forward.6} parent=0 // pred_check
    _
  $region31: #{decoder_forward.6} parent=0 // pred_check_branch
    %246 = sbr.rel (0) target = $region33
  $region32: #{decoder_forward.6} parent=0 // pred_region
    _
  $region33: #{decoder_forward.6} parent=0 // pred_fallthru
    _
  // Predicated region
  $region34: #{decoder_forward.6} parent=0 // pred_check
    _
  $region35: #{decoder_forward.6} parent=0 // pred_check_branch
    %248 = sbr.rel (0) target = $region37
  $region36: #{decoder_forward.6} parent=0 // pred_region
    _
  $region37: #{decoder_forward.6} parent=0 // pred_fallthru
    _

// kernel: decoder_forward.7
$region0: #{decoder_forward.7}
  #allocation0 [shape = 'u32[]', space=smem, size = 0x4, offset = 0x4, fixed_abs, tag = 'smem constant byte address 0x4 - core index']
  #allocation1 [shape = 'u32[144,128]{1,0:T(1,128)}', space=vmem, size = 0x12000, scoped, tag = 'internal scratch']
  #allocation2 [shape = 'f32[16,1]{1,0:T(8,128)}', space=vmem, size = 0x2000, scoped, tag = 'scratch operand']
  #allocation3 [shape = 'f32[16,1]{1,0:T(8,128)}', space=vmem, size = 0x2000, scoped, tag = 'scratch operand']
  %s0 = inlined_call_operand.vmem [shape: bf16[16,32], index: 0, kind: input, shape index: {}]
  %s1 = inlined_call_operand.vmem [shape: bf16[32,16], index: 1, kind: input, shape index: {}]
  %s2 = inlined_call_operand.vmem [shape: f32[1,16], index: 2, kind: input, shape index: {}]
  %s3 = inlined_call_operand.hbm [shape: f32[16,16], index: 3, kind: output, shape index: {}]
  %s4 = sld [smem:[#allocation0]]
  $region57: #{decoder_forward.7} parent=0
    _
  %s6 = ssub.s32 1, %s4
  %s7 = scalar_select 0, %s6, %s4
  $region1: #{decoder_forward.7} parent=0
    #allocation4 [shape = 'u8[8192]{0}', space=vmem, size = 0x2000, scoped, tag = 'output window, operand 0, single buffered']
    #allocation5 [shape = 's32[2]{0}', space=sflag, size = 0x8, scoped, tag = 'scoped memory for decoder_forward.7']
    %8 = vsyncpa [#allocation5], 0
    loop: start=0, step=1, limit=4
    $region2: #{decoder_forward.7} parent=1 // loop_pre_header
      _
    $region3: #{decoder_forward.7} parent=1 // loop_header
      %s10 = sphi 0, %s14
      %p11 = scmp.ge.s32.totalorder %s10, 4
      %s17 = sphi 0, %s36
      %s18 = sphi 0, %s32
      %s19 = sphi 0, %s28
      %s20 = sphi 0, %s17
      %s21 = sphi 0, %s18
      %s22 = sphi 0, %s19
      %s23 = sphi 0, %s20
      %s24 = sphi 0, %s21
      %s25 = sphi 0, %s22
      %s39 = sphi 0, %s41
      %s42 = sphi 0, %s39
      %s43 = sphi 0, %s42
      %s59 = sphi 0, %s43
      %s65 = sphi 0, %s67
      %s68 = sphi 0, %s65
      %s69 = sphi 0, %s68
      %s85 = sphi 0, %s69
      %s91 = sphi 0, %s93
      %s94 = sphi 0, %s91
      %s95 = sphi 0, %s94
      %s111 = sphi 0, %s95
      %s119 = sphi 0, %s121
      %s122 = sphi 0, %s119
      %s123 = sphi 0, %s122
      %s139 = sphi 0, %s123
    $region4: #{decoder_forward.7} parent=1 // loop_header_branch
      %13 = sbr.rel (%p11) target = $region8
    $region5: #{decoder_forward.7} parent=1 // loop_body
      %s15 = ssub.s32 %s10, 1
      %s16 = ssub.s32 %s10, 2
      %s26 = sadd.s32 1, %s19
      %p27 = scmp.ge.s32.totalorder %s26, 1
      %s28 = scalar_select %p27, 0, %s26
      %s29 = sadd.s32 1, %s18
      %s30 = scalar_select %p27, %s29, %s18
      %p31 = scmp.ge.s32.totalorder %s30, 2
      %s32 = scalar_select %p31, 0, %s30
      %s33 = sadd.s32 1, %s17
      %s34 = scalar_select %p31, %s33, %s17
      %p35 = scmp.ge.s32.totalorder %s34, 1
      %s36 = scalar_select %p35, 0, %s34
      %s37 = ssub.s32 %s17, %s36
      %p38 = scmp.eq.s32.totalorder %s37, 0
      %s40 = sadd.s32 %s39, 1
      %s41 = scalar_select %p38, %s39, %s40
      %p44 = pneg %p38
      %p45 = scmp.eq.s32.totalorder %s10, 1
      %p46 = por %p44, %p45
      %p47 = scmp.ne.s32.totalorder %s39, %s42
      %p48 = scmp.eq.s32.totalorder %s10, 0
      %p49 = por %p47, %p48
      %p50 = scmp.ne.s32.totalorder %s39, %s42
      %p51 = scmp.eq.s32.totalorder %s15, 1
      %p52 = por %p50, %p51
      %p53 = scmp.ne.s32.totalorder %s42, %s43
      %p54 = scmp.eq.s32.totalorder %s15, 0
      %p55 = por %p53, %p54
      %p56 = scmp.ne.s32.totalorder %s42, %s43
      %p57 = scmp.eq.s32.totalorder %s16, 1
      %p58 = por %p56, %p57
      %p60 = scmp.ne.s32.totalorder %s43, %s59
      %p61 = scmp.eq.s32.totalorder %s16, 0
      %p62 = por %p60, %p61
      %s63 = ssub.s32 %s19, %s28
      %p64 = scmp.eq.s32.totalorder %s63, 0
      %s66 = sadd.s32 %s65, 1
      %s67 = scalar_select %p64, %s65, %s66
      %p70 = pneg %p64
      %p71 = scmp.eq.s32.totalorder %s10, 1
      %p72 = por %p70, %p71
      %p73 = scmp.ne.s32.totalorder %s65, %s68
      %p74 = scmp.eq.s32.totalorder %s10, 0
      %p75 = por %p73, %p74
      %p76 = scmp.ne.s32.totalorder %s65, %s68
      %p77 = scmp.eq.s32.totalorder %s15, 1
      %p78 = por %p76, %p77
      %p79 = scmp.ne.s32.totalorder %s68, %s69
      %p80 = scmp.eq.s32.totalorder %s15, 0
      %p81 = por %p79, %p80
      %p82 = scmp.ne.s32.totalorder %s68, %s69
      %p83 = scmp.eq.s32.totalorder %s16, 1
      %p84 = por %p82, %p83
      %p86 = scmp.ne.s32.totalorder %s69, %s85
      %p87 = scmp.eq.s32.totalorder %s16, 0
      %p88 = por %p86, %p87
      %s89 = ssub.s32 %s19, %s28
      %p90 = scmp.eq.s32.totalorder %s89, 0
      %s92 = sadd.s32 %s91, 1
      %s93 = scalar_select %p90, %s91, %s92
      %p96 = pneg %p90
      %p97 = scmp.eq.s32.totalorder %s10, 1
      %p98 = por %p96, %p97
      %p99 = scmp.ne.s32.totalorder %s91, %s94
      %p100 = scmp.eq.s32.totalorder %s10, 0
      %p101 = por %p99, %p100
      %p102 = scmp.ne.s32.totalorder %s91, %s94
      %p103 = scmp.eq.s32.totalorder %s15, 1
      %p104 = por %p102, %p103
      %p105 = scmp.ne.s32.totalorder %s94, %s95
      %p106 = scmp.eq.s32.totalorder %s15, 0
      %p107 = por %p105, %p106
      %p108 = scmp.ne.s32.totalorder %s94, %s95
      %p109 = scmp.eq.s32.totalorder %s16, 1
      %p110 = por %p108, %p109
      %p112 = scmp.ne.s32.totalorder %s95, %s111
      %p113 = scmp.eq.s32.totalorder %s16, 0
      %p114 = por %p112, %p113
      %s115 = ssub.s32 %s17, %s36
      %s116 = ssub.s32 %s19, %s28
      %s117 = sor.u32 %s115, %s116
      %p118 = scmp.eq.s32.totalorder %s117, 0
      %s120 = sadd.s32 %s119, 1
      %s121 = scalar_select %p118, %s119, %s120
      %p124 = pneg %p118
      %p125 = scmp.eq.s32.totalorder %s10, 1
      %p126 = por %p124, %p125
      %p127 = scmp.ne.s32.totalorder %s119, %s122
      %p128 = scmp.eq.s32.totalorder %s10, 0
      %p129 = por %p127, %p128
      %p130 = scmp.ne.s32.totalorder %s119, %s122
      %p131 = scmp.eq.s32.totalorder %s15, 1
      %p132 = por %p130, %p131
      %p133 = scmp.ne.s32.totalorder %s122, %s123
      %p134 = scmp.eq.s32.totalorder %s15, 0
      %p135 = por %p133, %p134
      %p136 = scmp.ne.s32.totalorder %s122, %s123
      %p137 = scmp.eq.s32.totalorder %s16, 1
      %p138 = por %p136, %p137
      %p140 = scmp.ne.s32.totalorder %s123, %s139
      %p141 = scmp.eq.s32.totalorder %s16, 0
      %p142 = por %p140, %p141
      %p143 = scmp.le.s32.totalorder 1, %s10
      %p144 = scmp.lt.s32.totalorder %s10, 3
      %p145 = pnand %p143, %p144
      %p146 = pneg %p145
      // Predicated region
      $region9: #{decoder_forward.7} parent=5 // pred_check
        _
      $region10: #{decoder_forward.7} parent=5 // pred_check_branch
        %148 = sbr.rel (%p145) target = $region12
      $region11: #{decoder_forward.7} parent=5 // pred_region
        %s149 = ssub.s32 %s10, 1
        // Predicated region
        $region13: #{decoder_forward.7} parent=11 // pred_check
          %p150 = pneg %p55
        $region14: #{decoder_forward.7} parent=11 // pred_check_branch
          %152 = sbr.rel (%p150) target = $region16
        $region15: #{decoder_forward.7} parent=11 // pred_region
          %s153 = smul.u32 2, %s20
          %p154 = scmp.lt.s32.totalorder %s153, 1
          %s155 = scalar_select %p154, %s153, 1
          %s156 = smul.addr %s155, 4
          %s157 = scalar_lea.vmem %s0, %s156
          %s158 = smul.u32 2, %s20
        $region16: #{decoder_forward.7} parent=11 // pred_fallthru
          _
        // Predicated region
        $region17: #{decoder_forward.7} parent=11 // pred_check
          %p159 = pneg %p81
        $region18: #{decoder_forward.7} parent=11 // pred_check_branch
          %161 = sbr.rel (%p159) target = $region20
        $region19: #{decoder_forward.7} parent=11 // pred_region
          %p162 = scmp.lt.s32.totalorder %s22, 0
          %s163 = scalar_select %p162, %s22, 0
          %s164 = smul.addr %s163, 4
          %s165 = scalar_lea.vmem %s1, %s164
        $region20: #{decoder_forward.7} parent=11 // pred_fallthru
          _
        // Predicated region
        $region21: #{decoder_forward.7} parent=11 // pred_check
          %p166 = pneg %p107
        $region22: #{decoder_forward.7} parent=11 // pred_check_branch
          %168 = sbr.rel (%p166) target = $region24
        $region23: #{decoder_forward.7} parent=11 // pred_region
          %p169 = scmp.lt.s32.totalorder %s22, 0
          %s170 = scalar_select %p169, %s22, 0
          %s171 = scalar_lea.vmem %s2, %s170
        $region24: #{decoder_forward.7} parent=11 // pred_fallthru
          _
      $region12: #{decoder_forward.7} parent=5 // pred_fallthru
        _
      %p172 = scmp.lt.s32.totalorder %s10, 2
      // Predicated region
      $region25: #{decoder_forward.7} parent=5 // pred_check
        %p173 = pneg %p172
      $region26: #{decoder_forward.7} parent=5 // pred_check_branch
        %175 = sbr.rel (%p173) target = $region28
      $region27: #{decoder_forward.7} parent=5 // pred_region
        _
      $region28: #{decoder_forward.7} parent=5 // pred_fallthru
        _
      %p176 = scmp.le.s32.totalorder 1, %s10
      %p177 = scmp.lt.s32.totalorder %s10, 3
      %p178 = pnand %p176, %p177
      %p179 = pneg %p178
      // Predicated region
      $region29: #{decoder_forward.7} parent=5 // pred_check
        _
      $region30: #{decoder_forward.7} parent=5 // pred_check_branch
        %181 = sbr.rel (%p178) target = $region32
      $region31: #{decoder_forward.7} parent=5 // pred_region
        %s182 = ssub.s32 %s10, 1
        %s183 = smul.u32 2, %s20
        %p184 = scmp.lt.s32.totalorder %s183, 1
        %s185 = scalar_select %p184, %s183, 1
        %s186 = smul.addr %s185, 4
        %s187 = scalar_lea.vmem %s0, %s186
        %p188 = pneg %p55
        %p189 = pneg %p52
        %p190 = scmp.lt.s32.totalorder %s22, 0
        %s191 = scalar_select %p190, %s22, 0
        %s192 = smul.addr %s191, 4
        %s193 = scalar_lea.vmem %s1, %s192
        %p194 = pneg %p81
        %p195 = pneg %p78
        %p196 = scmp.lt.s32.totalorder %s22, 0
        %s197 = scalar_select %p196, %s22, 0
        %s198 = scalar_lea.vmem %s2, %s197
        %p199 = pneg %p107
        %p200 = pneg %p104
        %p201 = pneg %p135
        %p202 = pneg %p132
        %s203 = smul.u32 2, %s20
        %p204 = scmp.lt.s32.totalorder %s203, 1
        %s205 = scalar_select %p204, %s203, 1
        %s206 = smul.addr %s205, 4
        %s207 = scalar_lea.vmem %s0, %s206
        %s208 = smul.u32 2, %s20
        %p209 = scmp.lt.s32.totalorder %s22, 0
        %s210 = scalar_select %p209, %s22, 0
        %s211 = smul.addr %s210, 4
        %s212 = scalar_lea.vmem %s1, %s211
        %p213 = scmp.lt.s32.totalorder %s22, 0
        %s214 = scalar_select %p213, %s22, 0
        %s215 = scalar_lea.vmem %s2, %s214
        %s216 = smul.u32 2, %s20
        %v218 = vld [vmem:[%s207] sm:$0xf]
        %v219 = vld [vmem:[%s207 + $0x4] sm:$0xf]
        %v220 = vld [vmem:[%s212] sm:$0xf]
        %v221 = vld [vmem:[%s212 + $0x4] sm:$0xf]
        %v222 = vld [vmem:[%s212 + $0x8] sm:$0xf]
        %v223 = vld [vmem:[%s212 + $0xc] sm:$0xf]
        %v224 = vld [vmem:[%s215] sm:$0x1]
        %v226 = vlaneseq
        %v227 = vshrl.u32 %v226, 7
        %v228 = vsub.s32 0, %v227
        %v229 = vrot.slane %v224, %v228
        %v233 = vunpack.c.l.b16 %v218
        %v234 = vunpack.c.l.b16 %v219
        %v235 = vpack.c.b16 %v234, %v233
        %v240 = vunpack.c.l.b16 %v220
        %v241 = vunpack.c.l.b16 %v221
        %v242 = vunpack.c.l.b16 %v222
        %v243 = vunpack.c.l.b16 %v223
        %v244 = vpack.c.b16 %v241, %v240
        %v245 = vpack.c.b16 %v243, %v242
        %vm248 = vcmask 261120
        %v250 = vsel %vm248, %v235, 0
        %252 = vmatprep.subr.bf16.mxu0 0
        %253 = vmatpush1.bf16.msra.mxu0 %v244
        %254 = vmatprep.subr.bf16.mxu0 0
        %255 = vmatpush1.bf16.msra.mxu0 %v245
        %256 = vmatprep.subr.bf16.mxu0 0
        %257 = vmatpush1.bf16.msra.mxu0 0
        %258 = vmatprep.subr.bf16.mxu0 0
        %259 = vmatpush1.bf16.msra.mxu0 0
        %260 = vmatprep.subr.bf16.mxu0 0
        %261 = vmatpush1.bf16.msra.mxu0 0
        %262 = vmatprep.subr.bf16.mxu0 0
        %263 = vmatpush1.bf16.msra.mxu0 0
        %264 = vmatprep.subr.bf16.mxu0 0
        %265 = vmatpush1.bf16.msra.mxu0 0
        %266 = vmatprep.subr.bf16.mxu0 0
        %267 = vmatpush1.bf16.msra.mxu0 0
        %268 = vmatprep.subr.bf16.mxu0 0
        %269 = vmatpush1.bf16.msra.mxu0 0
        %270 = vmatprep.subr.bf16.mxu0 0
        %271 = vmatpush1.bf16.msra.mxu0 0
        %272 = vmatprep.subr.bf16.mxu0 0
        %273 = vmatpush1.bf16.msra.mxu0 0
        %274 = vmatprep.subr.bf16.mxu0 0
        %275 = vmatpush1.bf16.msra.mxu0 0
        %276 = vmatprep.subr.bf16.mxu0 0
        %277 = vmatpush1.bf16.msra.mxu0 0
        %278 = vmatprep.subr.bf16.mxu0 0
        %279 = vmatpush1.bf16.msra.mxu0 0
        %280 = vmatprep.subr.bf16.mxu0 0
        %281 = vmatpush1.bf16.msra.mxu0 0
        %282 = vmatprep.subr.bf16.mxu0 0
        %283 = vmatpush1.bf16.msra.mxu0 0
        %284 = vmatprep.mubr.bf16.mxu0 0
        %285 = vmatmul.mubr.bf16.gmra.mrb[0].mxu0 %v250
        %v286 = vpop.f32.mrb[0].mxu0
        %v287 = vadd.f32 %v229, %v286
        %v288 = vpop.f32.mrb[0].mxu0
        %v289 = vpop.f32.mrb[0].mxu0
        %v290 = vadd.f32 %v229, %v289
        %v291 = vpop.f32.mrb[0].mxu0
        %292 = vdwg.mxu0
        %p293 = scmp.eq.s32.totalorder %s21, 0
        %p294 = scmp.eq.s32.totalorder %s22, 0
        %p295 = pnand %p293, %p294
        %p296 = pneg %p295
        // Predicated region
        $region33: #{decoder_forward.7} parent=31 // pred_check
          _
        $region34: #{decoder_forward.7} parent=31 // pred_check_branch
          %298 = sbr.rel (%p295) target = $region36
        $region35: #{decoder_forward.7} parent=31 // pred_region
          %vm299 = vcmask 7168
          %300 = vst.msk [vmem:[#allocation2] sm:$0xff] %vm299, -inf
          %301 = vst.msk [vmem:[#allocation2 + $0x8] sm:$0xff] %vm299, -inf
          %302 = vst.msk [vmem:[#allocation3] sm:$0xff] %vm299, 0.0
          %303 = vst.msk [vmem:[#allocation3 + $0x8] sm:$0xff] %vm299, 0.0
        $region36: #{decoder_forward.7} parent=31 // pred_fallthru
          _
        // Predicated region
        $region37: #{decoder_forward.7} parent=31 // pred_check
          %p304 = pneg %p293
        $region38: #{decoder_forward.7} parent=31 // pred_check_branch
          %306 = sbr.rel (%p304) target = $region40
        $region39: #{decoder_forward.7} parent=31 // pred_region
          %v307 = vld [vmem:[#allocation2] sm:$0xff]
          %v308 = vld [vmem:[#allocation2 + $0x8] sm:$0xff]
          %vm309 = vcmask 130048
          %v310 = vsel %vm309, %v287, -inf
          %311 = vmax.xlane.f32.xlu0 %v310
          %v312 = vpop.xlane.xlu0 %311
          %v313 = vsel %vm309, %v290, -inf
          %314 = vmax.xlane.f32.xlu0 %v313
          %v315 = vpop.xlane.xlu0 %314
          %v316 = vmax.f32 %v307, %v312
          %v317 = vmax.f32 %v308, %v315
          %v318 = vld [vmem:[#allocation3] sm:$0xff]
          %v319 = vld [vmem:[#allocation3 + $0x8] sm:$0xff]
          %v320 = vsub.f32 %v307, %v316
          %v321 = vsub.f32 %v308, %v317
          %v322 = vmul.f32 %v320, 1.442695
          %v323 = vpow.pop %v322
          %v324 = vmul.f32 %v321, 1.442695
          %v325 = vpow.pop %v324
          %v326 = vmul.f32 %v318, %v323
          %v327 = vmul.f32 %v319, %v325
          %329 = vset.pattern.permute.xlu0 0
          %330 = vperm.xlu0 %329, %v316
          %v331 = vpop.permute.xlu0 %330
          %334 = vset.pattern.permute.xlu0 0
          %335 = vperm.xlu0 %334, %v317
          %v336 = vpop.permute.xlu0 %335
          %v338 = vsub.f32 %v287, %v331
          %v339 = vsub.f32 %v290, %v336
          %v340 = vmul.f32 %v338, 1.442695
          %v341 = vpow.pop %v340
          %v342 = vmul.f32 %v339, 1.442695
          %v343 = vpow.pop %v342
          %v344 = vsel %vm309, %v341, 0.0
          %345 = vadd.xlane.f32.xlu0 %v344
          %v346 = vpop.xlane.xlu0 %345
          %v347 = vsel %vm309, %v343, 0.0
          %348 = vadd.xlane.f32.xlu0 %v347
          %v349 = vpop.xlane.xlu0 %348
          %v350 = vadd.f32 %v326, %v346
          %v351 = vadd.f32 %v327, %v349
          %vm352 = vcmask 7168
          %353 = vst.msk [vmem:[#allocation3] sm:$0xff] %vm352, %v350
          %354 = vst.msk [vmem:[#allocation3 + $0x8] sm:$0xff] %vm352, %v351
          %355 = vst.msk [vmem:[#allocation2] sm:$0xff] %vm352, %v316
          %356 = vst.msk [vmem:[#allocation2 + $0x8] sm:$0xff] %vm352, %v317
          %357 = vst.msk [vmem:[#allocation4] sm:$0xff] %vm309, %v287
          %358 = vst.msk [vmem:[#allocation4 + $0x8] sm:$0xff] %vm309, %v290
        $region40: #{decoder_forward.7} parent=31 // pred_fallthru
          _
        %p359 = scmp.eq.s32.totalorder %s21, 1
        // Predicated region
        $region41: #{decoder_forward.7} parent=31 // pred_check
          %p360 = pneg %p359
        $region42: #{decoder_forward.7} parent=31 // pred_check_branch
          %362 = sbr.rel (%p360) target = $region44
        $region43: #{decoder_forward.7} parent=31 // pred_region
          %v363 = vld [vmem:[#allocation2] sm:$0xff]
          %v364 = vld [vmem:[#allocation2 + $0x8] sm:$0xff]
          %366 = vset.pattern.permute.xlu0 0
          %367 = vperm.xlu0 %366, %v363
          %v368 = vpop.permute.xlu0 %367
          %371 = vset.pattern.permute.xlu0 0
          %372 = vperm.xlu0 %371, %v364
          %v373 = vpop.permute.xlu0 %372
          %v375 = vsub.f32 %v287, %v368
          %v376 = vsub.f32 %v290, %v373
          %v377 = vmul.f32 %v375, 1.442695
          %v378 = vpow.pop %v377
          %v379 = vmul.f32 %v376, 1.442695
          %v380 = vpow.pop %v379
          %v381 = vld [vmem:[#allocation3] sm:$0xff]
          %v382 = vld [vmem:[#allocation3 + $0x8] sm:$0xff]
          %384 = vset.pattern.permute.xlu0 0
          %385 = vperm.xlu0 %384, %v381
          %v386 = vpop.permute.xlu0 %385
          %389 = vset.pattern.permute.xlu0 0
          %390 = vperm.xlu0 %389, %v382
          %v391 = vpop.permute.xlu0 %390
          %v393 = vrcp.pop %v386
          %v394 = vmul.f32 %v378, %v393
          %v395 = vrcp.pop %v391
          %v396 = vmul.f32 %v380, %v395
          %vm397 = vcmask 130048
          %398 = vst.msk [vmem:[#allocation4] sm:$0xff] %vm397, %v394
          %399 = vst.msk [vmem:[#allocation4 + $0x8] sm:$0xff] %vm397, %v396
        $region44: #{decoder_forward.7} parent=31 // pred_fallthru
          _
        // Predicated region
        $region45: #{decoder_forward.7} parent=31 // pred_check
          %p400 = pneg %p132
        $region46: #{decoder_forward.7} parent=31 // pred_check_branch
          %402 = sbr.rel (%p400) target = $region48
        $region47: #{decoder_forward.7} parent=31 // pred_region
          %s403 = smul.u32 2, %s20
          %s405 = ssub.s32 256, 256
          %406 = vsyncadd [#allocation5], %s405
          %s407 = sadd.s32 %s22, %s403
          %s408 = smul.addr %s407, 128
          %s409 = scalar_lea.hbm %s3, %s408
          %s410 = sshll.u32 [#allocation4], 4
          %s411 = int_to_ptr.vmem [resolvable:$true] %s410
          %416 = dma.vmem_to_hbm [thread:$0]  %s411, 256, %s409, [#allocation5], 128, 128, 8
        $region48: #{decoder_forward.7} parent=31 // pred_fallthru
          _
        // Predicated region
        $region49: #{decoder_forward.7} parent=31 // pred_check
          %p417 = pneg %p132
        $region50: #{decoder_forward.7} parent=31 // pred_check_branch
          %419 = sbr.rel (%p417) target = $region52
        $region51: #{decoder_forward.7} parent=31 // pred_region
          %420 = dma.done [#allocation5], 256
        $region52: #{decoder_forward.7} parent=31 // pred_fallthru
          _
      $region32: #{decoder_forward.7} parent=5 // pred_fallthru
        _
      %p421 = scmp.le.s32.totalorder 2, %s10
      // Predicated region
      $region53: #{decoder_forward.7} parent=5 // pred_check
        %p422 = pneg %p421
      $region54: #{decoder_forward.7} parent=5 // pred_check_branch
        %424 = sbr.rel (%p422) target = $region56
      $region55: #{decoder_forward.7} parent=5 // pred_region
        %s425 = ssub.s32 %s10, 2
      $region56: #{decoder_forward.7} parent=5 // pred_fallthru
        _
    $region6: #{decoder_forward.7} parent=1 // loop_footer
      %s14 = sadd.s32 1, %s10
    $region7: #{decoder_forward.7} parent=1 // loop_footer_branch
      %9 = sbr.rel target = $region3
    $region8: #{decoder_forward.7} parent=1 // loop_exit
      _
    %426 = vsyncpa [#allocation5], 1
    %s427 = scalar_lea.sflag [#allocation5], 1
    %428 = vsyncpa %s427, 1

// kernel: decoder_forward.4
$region0: #{decoder_forward.4}
  #allocation0 [shape = 'u32[]', space=smem, size = 0x4, offset = 0x4, fixed_abs, tag = 'smem constant byte address 0x4 - core index']
  #allocation1 [shape = 'u32[144,128]{1,0:T(1,128)}', space=vmem, size = 0x12000, scoped, tag = 'internal scratch']
  %s0 = inlined_call_operand.vmem [shape: bf16[2,8,32], index: 0, kind: input, shape index: {}, may-alias: {0,1}]
  %s1 = inlined_call_operand.vmem [shape: bf16[2,8,32], index: 1, kind: input, shape index: {}, may-alias: {0,1}]
  %s2 = inlined_call_operand.vmem [shape: f32[2,8,8], index: 2, kind: input, shape index: {}]
  %s3 = inlined_call_operand.vmem [shape: bf16[32,32], index: 3, kind: input, shape index: {}]
  %s4 = inlined_call_operand.vmem [shape: f32[1,32], index: 4, kind: input, shape index: {}]
  %s5 = inlined_call_operand.vmem [shape: bf16[32,64], index: 5, kind: input, shape index: {}]
  %s6 = inlined_call_operand.vmem [shape: f32[1,64], index: 6, kind: input, shape index: {}]
  %s7 = inlined_call_operand.vmem [shape: bf16[32,32], index: 7, kind: input, shape index: {}]
  %s8 = inlined_call_operand.vmem [shape: f32[1,32], index: 8, kind: input, shape index: {}]
  %s9 = inlined_call_operand.vmem [shape: f32[1,32], index: 9, kind: input, shape index: {}]
  %s10 = inlined_call_operand.vmem [shape: f32[1,32], index: 10, kind: input, shape index: {}]
  %s11 = inlined_call_operand.vmem [shape: bf16[2,8,32], index: 11, kind: output, shape index: {}]
  %s12 = sld [smem:[#allocation0]]
  $region77: #{decoder_forward.4} parent=0
    _
  %s14 = ssub.s32 1, %s12
  %s15 = scalar_select 0, %s14, %s12
  loop: start=0, step=1, limit=4
  $region2: #{decoder_forward.4} parent=0 // loop_pre_header
    _
  $region3: #{decoder_forward.4} parent=0 // loop_header
    %s17 = sphi 0, %s21
    %p18 = scmp.ge.s32.totalorder %s17, 4
    %s27 = sphi 0, %s29
    %s30 = sphi 0, %s27
    %s31 = sphi 0, %s30
    %s47 = sphi 0, %s31
    %s53 = sphi 0, %s55
    %s56 = sphi 0, %s53
    %s57 = sphi 0, %s56
    %s73 = sphi 0, %s57
    %s79 = sphi 0, %s81
    %s82 = sphi 0, %s79
    %s83 = sphi 0, %s82
    %s99 = sphi 0, %s83
    %s103 = sphi 0, %s103
    %s105 = sphi 0, %s103
    %s106 = sphi 0, %s105
    %s120 = sphi 0, %s106
    %s124 = sphi 0, %s124
    %s126 = sphi 0, %s124
    %s127 = sphi 0, %s126
    %s141 = sphi 0, %s127
    %s145 = sphi 0, %s145
    %s147 = sphi 0, %s145
    %s148 = sphi 0, %s147
    %s162 = sphi 0, %s148
    %s166 = sphi 0, %s166
    %s168 = sphi 0, %s166
    %s169 = sphi 0, %s168
    %s183 = sphi 0, %s169
    %s187 = sphi 0, %s187
    %s189 = sphi 0, %s187
    %s190 = sphi 0, %s189
    %s204 = sphi 0, %s190
    %s208 = sphi 0, %s208
    %s210 = sphi 0, %s208
    %s211 = sphi 0, %s210
    %s225 = sphi 0, %s211
    %s229 = sphi 0, %s229
    %s231 = sphi 0, %s229
    %s232 = sphi 0, %s231
    %s246 = sphi 0, %s232
    %s250 = sphi 0, %s250
    %s252 = sphi 0, %s250
    %s253 = sphi 0, %s252
    %s267 = sphi 0, %s253
    %s273 = sphi 0, %s275
    %s276 = sphi 0, %s273
    %s277 = sphi 0, %s276
    %s293 = sphi 0, %s277
  $region4: #{decoder_forward.4} parent=0 // loop_header_branch
    %20 = sbr.rel (%p18) target = $region8
  $region5: #{decoder_forward.4} parent=0 // loop_body
    %s22 = ssub.s32 %s17, 1
    %s23 = ssub.s32 %s17, 2
    %s24 = sadd.s32 %s17, 1
    %s25 = ssub.s32 %s17, %s24
    %p26 = scmp.eq.s32.totalorder %s25, 0
    %s28 = sadd.s32 %s27, 1
    %s29 = scalar_select %p26, %s27, %s28
    %p32 = pneg %p26
    %p33 = scmp.eq.s32.totalorder %s17, 1
    %p34 = por %p32, %p33
    %p35 = scmp.ne.s32.totalorder %s27, %s30
    %p36 = scmp.eq.s32.totalorder %s17, 0
    %p37 = por %p35, %p36
    %p38 = scmp.ne.s32.totalorder %s27, %s30
    %p39 = scmp.eq.s32.totalorder %s22, 1
    %p40 = por %p38, %p39
    %p41 = scmp.ne.s32.totalorder %s30, %s31
    %p42 = scmp.eq.s32.totalorder %s22, 0
    %p43 = por %p41, %p42
    %p44 = scmp.ne.s32.totalorder %s30, %s31
    %p45 = scmp.eq.s32.totalorder %s23, 1
    %p46 = por %p44, %p45
    %p48 = scmp.ne.s32.totalorder %s31, %s47
    %p49 = scmp.eq.s32.totalorder %s23, 0
    %p50 = por %p48, %p49
    %s51 = ssub.s32 %s17, %s24
    %p52 = scmp.eq.s32.totalorder %s51, 0
    %s54 = sadd.s32 %s53, 1
    %s55 = scalar_select %p52, %s53, %s54
    %p58 = pneg %p52
    %p59 = scmp.eq.s32.totalorder %s17, 1
    %p60 = por %p58, %p59
    %p61 = scmp.ne.s32.totalorder %s53, %s56
    %p62 = scmp.eq.s32.totalorder %s17, 0
    %p63 = por %p61, %p62
    %p64 = scmp.ne.s32.totalorder %s53, %s56
    %p65 = scmp.eq.s32.totalorder %s22, 1
    %p66 = por %p64, %p65
    %p67 = scmp.ne.s32.totalorder %s56, %s57
    %p68 = scmp.eq.s32.totalorder %s22, 0
    %p69 = por %p67, %p68
    %p70 = scmp.ne.s32.totalorder %s56, %s57
    %p71 = scmp.eq.s32.totalorder %s23, 1
    %p72 = por %p70, %p71
    %p74 = scmp.ne.s32.totalorder %s57, %s73
    %p75 = scmp.eq.s32.totalorder %s23, 0
    %p76 = por %p74, %p75
    %s77 = ssub.s32 %s17, %s24
    %p78 = scmp.eq.s32.totalorder %s77, 0
    %s80 = sadd.s32 %s79, 1
    %s81 = scalar_select %p78, %s79, %s80
    %p84 = pneg %p78
    %p85 = scmp.eq.s32.totalorder %s17, 1
    %p86 = por %p84, %p85
    %p87 = scmp.ne.s32.totalorder %s79, %s82
    %p88 = scmp.eq.s32.totalorder %s17, 0
    %p89 = por %p87, %p88
    %p90 = scmp.ne.s32.totalorder %s79, %s82
    %p91 = scmp.eq.s32.totalorder %s22, 1
    %p92 = por %p90, %p91
    %p93 = scmp.ne.s32.totalorder %s82, %s83
    %p94 = scmp.eq.s32.totalorder %s22, 0
    %p95 = por %p93, %p94
    %p96 = scmp.ne.s32.totalorder %s82, %s83
    %p97 = scmp.eq.s32.totalorder %s23, 1
    %p98 = por %p96, %p97
    %p100 = scmp.ne.s32.totalorder %s83, %s99
    %p101 = scmp.eq.s32.totalorder %s23, 0
    %p102 = por %p100, %p101
    %s104 = sadd.s32 %s103, 1
    %p107 = scmp.eq.s32.totalorder %s17, 1
    %p108 = scmp.ne.s32.totalorder %s103, %s105
    %p109 = scmp.eq.s32.totalorder %s17, 0
    %p110 = por %p108, %p109
    %p111 = scmp.ne.s32.totalorder %s103, %s105
    %p112 = scmp.eq.s32.totalorder %s22, 1
    %p113 = por %p111, %p112
    %p114 = scmp.ne.s32.totalorder %s105, %s106
    %p115 = scmp.eq.s32.totalorder %s22, 0
    %p116 = por %p114, %p115
    %p117 = scmp.ne.s32.totalorder %s105, %s106
    %p118 = scmp.eq.s32.totalorder %s23, 1
    %p119 = por %p117, %p118
    %p121 = scmp.ne.s32.totalorder %s106, %s120
    %p122 = scmp.eq.s32.totalorder %s23, 0
    %p123 = por %p121, %p122
    %s125 = sadd.s32 %s124, 1
    %p128 = scmp.eq.s32.totalorder %s17, 1
    %p129 = scmp.ne.s32.totalorder %s124, %s126
    %p130 = scmp.eq.s32.totalorder %s17, 0
    %p131 = por %p129, %p130
    %p132 = scmp.ne.s32.totalorder %s124, %s126
    %p133 = scmp.eq.s32.totalorder %s22, 1
    %p134 = por %p132, %p133
    %p135 = scmp.ne.s32.totalorder %s126, %s127
    %p136 = scmp.eq.s32.totalorder %s22, 0
    %p137 = por %p135, %p136
    %p138 = scmp.ne.s32.totalorder %s126, %s127
    %p139 = scmp.eq.s32.totalorder %s23, 1
    %p140 = por %p138, %p139
    %p142 = scmp.ne.s32.totalorder %s127, %s141
    %p143 = scmp.eq.s32.totalorder %s23, 0
    %p144 = por %p142, %p143
    %s146 = sadd.s32 %s145, 1
    %p149 = scmp.eq.s32.totalorder %s17, 1
    %p150 = scmp.ne.s32.totalorder %s145, %s147
    %p151 = scmp.eq.s32.totalorder %s17, 0
    %p152 = por %p150, %p151
    %p153 = scmp.ne.s32.totalorder %s145, %s147
    %p154 = scmp.eq.s32.totalorder %s22, 1
    %p155 = por %p153, %p154
    %p156 = scmp.ne.s32.totalorder %s147, %s148
    %p157 = scmp.eq.s32.totalorder %s22, 0
    %p158 = por %p156, %p157
    %p159 = scmp.ne.s32.totalorder %s147, %s148
    %p160 = scmp.eq.s32.totalorder %s23, 1
    %p161 = por %p159, %p160
    %p163 = scmp.ne.s32.totalorder %s148, %s162
    %p164 = scmp.eq.s32.totalorder %s23, 0
    %p165 = por %p163, %p164
    %s167 = sadd.s32 %s166, 1
    %p170 = scmp.eq.s32.totalorder %s17, 1
    %p171 = scmp.ne.s32.totalorder %s166, %s168
    %p172 = scmp.eq.s32.totalorder %s17, 0
    %p173 = por %p171, %p172
    %p174 = scmp.ne.s32.totalorder %s166, %s168
    %p175 = scmp.eq.s32.totalorder %s22, 1
    %p176 = por %p174, %p175
    %p177 = scmp.ne.s32.totalorder %s168, %s169
    %p178 = scmp.eq.s32.totalorder %s22, 0
    %p179 = por %p177, %p178
    %p180 = scmp.ne.s32.totalorder %s168, %s169
    %p181 = scmp.eq.s32.totalorder %s23, 1
    %p182 = por %p180, %p181
    %p184 = scmp.ne.s32.totalorder %s169, %s183
    %p185 = scmp.eq.s32.totalorder %s23, 0
    %p186 = por %p184, %p185
    %s188 = sadd.s32 %s187, 1
    %p191 = scmp.eq.s32.totalorder %s17, 1
    %p192 = scmp.ne.s32.totalorder %s187, %s189
    %p193 = scmp.eq.s32.totalorder %s17, 0
    %p194 = por %p192, %p193
    %p195 = scmp.ne.s32.totalorder %s187, %s189
    %p196 = scmp.eq.s32.totalorder %s22, 1
    %p197 = por %p195, %p196
    %p198 = scmp.ne.s32.totalorder %s189, %s190
    %p199 = scmp.eq.s32.totalorder %s22, 0
    %p200 = por %p198, %p199
    %p201 = scmp.ne.s32.totalorder %s189, %s190
    %p202 = scmp.eq.s32.totalorder %s23, 1
    %p203 = por %p201, %p202
    %p205 = scmp.ne.s32.totalorder %s190, %s204
    %p206 = scmp.eq.s32.totalorder %s23, 0
    %p207 = por %p205, %p206
    %s209 = sadd.s32 %s208, 1
    %p212 = scmp.eq.s32.totalorder %s17, 1
    %p213 = scmp.ne.s32.totalorder %s208, %s210
    %p214 = scmp.eq.s32.totalorder %s17, 0
    %p215 = por %p213, %p214
    %p216 = scmp.ne.s32.totalorder %s208, %s210
    %p217 = scmp.eq.s32.totalorder %s22, 1
    %p218 = por %p216, %p217
    %p219 = scmp.ne.s32.totalorder %s210, %s211
    %p220 = scmp.eq.s32.totalorder %s22, 0
    %p221 = por %p219, %p220
    %p222 = scmp.ne.s32.totalorder %s210, %s211
    %p223 = scmp.eq.s32.totalorder %s23, 1
    %p224 = por %p222, %p223
    %p226 = scmp.ne.s32.totalorder %s211, %s225
    %p227 = scmp.eq.s32.totalorder %s23, 0
    %p228 = por %p226, %p227
    %s230 = sadd.s32 %s229, 1
    %p233 = scmp.eq.s32.totalorder %s17, 1
    %p234 = scmp.ne.s32.totalorder %s229, %s231
    %p235 = scmp.eq.s32.totalorder %s17, 0
    %p236 = por %p234, %p235
    %p237 = scmp.ne.s32.totalorder %s229, %s231
    %p238 = scmp.eq.s32.totalorder %s22, 1
    %p239 = por %p237, %p238
    %p240 = scmp.ne.s32.totalorder %s231, %s232
    %p241 = scmp.eq.s32.totalorder %s22, 0
    %p242 = por %p240, %p241
    %p243 = scmp.ne.s32.totalorder %s231, %s232
    %p244 = scmp.eq.s32.totalorder %s23, 1
    %p245 = por %p243, %p244
    %p247 = scmp.ne.s32.totalorder %s232, %s246
    %p248 = scmp.eq.s32.totalorder %s23, 0
    %p249 = por %p247, %p248
    %s251 = sadd.s32 %s250, 1
    %p254 = scmp.eq.s32.totalorder %s17, 1
    %p255 = scmp.ne.s32.totalorder %s250, %s252
    %p256 = scmp.eq.s32.totalorder %s17, 0
    %p257 = por %p255, %p256
    %p258 = scmp.ne.s32.totalorder %s250, %s252
    %p259 = scmp.eq.s32.totalorder %s22, 1
    %p260 = por %p258, %p259
    %p261 = scmp.ne.s32.totalorder %s252, %s253
    %p262 = scmp.eq.s32.totalorder %s22, 0
    %p263 = por %p261, %p262
    %p264 = scmp.ne.s32.totalorder %s252, %s253
    %p265 = scmp.eq.s32.totalorder %s23, 1
    %p266 = por %p264, %p265
    %p268 = scmp.ne.s32.totalorder %s253, %s267
    %p269 = scmp.eq.s32.totalorder %s23, 0
    %p270 = por %p268, %p269
    %s271 = ssub.s32 %s17, %s24
    %p272 = scmp.eq.s32.totalorder %s271, 0
    %s274 = sadd.s32 %s273, 1
    %s275 = scalar_select %p272, %s273, %s274
    %p278 = pneg %p272
    %p279 = scmp.eq.s32.totalorder %s17, 1
    %p280 = por %p278, %p279
    %p281 = scmp.ne.s32.totalorder %s273, %s276
    %p282 = scmp.eq.s32.totalorder %s17, 0
    %p283 = por %p281, %p282
    %p284 = scmp.ne.s32.totalorder %s273, %s276
    %p285 = scmp.eq.s32.totalorder %s22, 1
    %p286 = por %p284, %p285
    %p287 = scmp.ne.s32.totalorder %s276, %s277
    %p288 = scmp.eq.s32.totalorder %s22, 0
    %p289 = por %p287, %p288
    %p290 = scmp.ne.s32.totalorder %s276, %s277
    %p291 = scmp.eq.s32.totalorder %s23, 1
    %p292 = por %p290, %p291
    %p294 = scmp.ne.s32.totalorder %s277, %s293
    %p295 = scmp.eq.s32.totalorder %s23, 0
    %p296 = por %p294, %p295
    %p297 = scmp.le.s32.totalorder 1, %s17
    %p298 = scmp.lt.s32.totalorder %s17, 3
    %p299 = pnand %p297, %p298
    %p300 = pneg %p299
    // Predicated region
    $region9: #{decoder_forward.4} parent=5 // pred_check
      _
    $region10: #{decoder_forward.4} parent=5 // pred_check_branch
      %302 = sbr.rel (%p299) target = $region12
    $region11: #{decoder_forward.4} parent=5 // pred_region
      %s303 = ssub.s32 %s17, 1
      // Predicated region
      $region13: #{decoder_forward.4} parent=11 // pred_check
        %p304 = pneg %p116
      $region14: #{decoder_forward.4} parent=11 // pred_check_branch
        %306 = sbr.rel (%p304) target = $region16
      $region15: #{decoder_forward.4} parent=11 // pred_region
        _
      $region16: #{decoder_forward.4} parent=11 // pred_fallthru
        _
      // Predicated region
      $region17: #{decoder_forward.4} parent=11 // pred_check
        %p307 = pneg %p137
      $region18: #{decoder_forward.4} parent=11 // pred_check_branch
        %309 = sbr.rel (%p307) target = $region20
      $region19: #{decoder_forward.4} parent=11 // pred_region
        _
      $region20: #{decoder_forward.4} parent=11 // pred_fallthru
        _
      // Predicated region
      $region21: #{decoder_forward.4} parent=11 // pred_check
        %p310 = pneg %p158
      $region22: #{decoder_forward.4} parent=11 // pred_check_branch
        %312 = sbr.rel (%p310) target = $region24
      $region23: #{decoder_forward.4} parent=11 // pred_region
        _
      $region24: #{decoder_forward.4} parent=11 // pred_fallthru
        _
      // Predicated region
      $region25: #{decoder_forward.4} parent=11 // pred_check
        %p313 = pneg %p179
      $region26: #{decoder_forward.4} parent=11 // pred_check_branch
        %315 = sbr.rel (%p313) target = $region28
      $region27: #{decoder_forward.4} parent=11 // pred_region
        _
      $region28: #{decoder_forward.4} parent=11 // pred_fallthru
        _
      // Predicated region
      $region29: #{decoder_forward.4} parent=11 // pred_check
        %p316 = pneg %p200
      $region30: #{decoder_forward.4} parent=11 // pred_check_branch
        %318 = sbr.rel (%p316) target = $region32
      $region31: #{decoder_forward.4} parent=11 // pred_region
        _
      $region32: #{decoder_forward.4} parent=11 // pred_fallthru
        _
      // Predicated region
      $region33: #{decoder_forward.4} parent=11 // pred_check
        %p319 = pneg %p221
      $region34: #{decoder_forward.4} parent=11 // pred_check_branch
        %321 = sbr.rel (%p319) target = $region36
      $region35: #{decoder_forward.4} parent=11 // pred_region
        _
      $region36: #{decoder_forward.4} parent=11 // pred_fallthru
        _
      // Predicated region
      $region37: #{decoder_forward.4} parent=11 // pred_check
        %p322 = pneg %p242
      $region38: #{decoder_forward.4} parent=11 // pred_check_branch
        %324 = sbr.rel (%p322) target = $region40
      $region39: #{decoder_forward.4} parent=11 // pred_region
        _
      $region40: #{decoder_forward.4} parent=11 // pred_fallthru
        _
      // Predicated region
      $region41: #{decoder_forward.4} parent=11 // pred_check
        %p325 = pneg %p263
      $region42: #{decoder_forward.4} parent=11 // pred_check_branch
        %327 = sbr.rel (%p325) target = $region44
      $region43: #{decoder_forward.4} parent=11 // pred_region
        _
      $region44: #{decoder_forward.4} parent=11 // pred_fallthru
        _
    $region12: #{decoder_forward.4} parent=5 // pred_fallthru
      _
    %p328 = scmp.lt.s32.totalorder %s17, 2
    // Predicated region
    $region45: #{decoder_forward.4} parent=5 // pred_check
      %p329 = pneg %p328
    $region46: #{decoder_forward.4} parent=5 // pred_check_branch
      %331 = sbr.rel (%p329) target = $region48
    $region47: #{decoder_forward.4} parent=5 // pred_region
      // Predicated region
      $region49: #{decoder_forward.4} parent=47 // pred_check
        %p332 = pneg %p37
      $region50: #{decoder_forward.4} parent=47 // pred_check_branch
        %334 = sbr.rel (%p332) target = $region52
      $region51: #{decoder_forward.4} parent=47 // pred_region
        %p335 = scmp.lt.s32.totalorder %s17, 1
        %s336 = scalar_select %p335, %s17, 1
        %s337 = smul.addr %s336, 4
        %s338 = scalar_lea.vmem %s0, %s337
      $region52: #{decoder_forward.4} parent=47 // pred_fallthru
        _
      // Predicated region
      $region53: #{decoder_forward.4} parent=47 // pred_check
        %p339 = pneg %p63
      $region54: #{decoder_forward.4} parent=47 // pred_check_branch
        %341 = sbr.rel (%p339) target = $region56
      $region55: #{decoder_forward.4} parent=47 // pred_region
        %p342 = scmp.lt.s32.totalorder %s17, 1
        %s343 = scalar_select %p342, %s17, 1
        %s344 = smul.addr %s343, 4
        %s345 = scalar_lea.vmem %s1, %s344
      $region56: #{decoder_forward.4} parent=47 // pred_fallthru
        _
      // Predicated region
      $region57: #{decoder_forward.4} parent=47 // pred_check
        %p346 = pneg %p89
      $region58: #{decoder_forward.4} parent=47 // pred_check_branch
        %348 = sbr.rel (%p346) target = $region60
      $region59: #{decoder_forward.4} parent=47 // pred_region
        %p349 = scmp.lt.s32.totalorder %s17, 1
        %s350 = scalar_select %p349, %s17, 1
        %s351 = smul.addr %s350, 8
        %s352 = scalar_lea.vmem %s2, %s351
      $region60: #{decoder_forward.4} parent=47 // pred_fallthru
        _
    $region48: #{decoder_forward.4} parent=5 // pred_fallthru
      _
    %p353 = scmp.le.s32.totalorder 1, %s17
    %p354 = scmp.lt.s32.totalorder %s17, 3
    %p355 = pnand %p353, %p354
    %p356 = pneg %p355
    // Predicated region
    $region61: #{decoder_forward.4} parent=5 // pred_check
      _
    $region62: #{decoder_forward.4} parent=5 // pred_check_branch
      %358 = sbr.rel (%p355) target = $region64
    $region63: #{decoder_forward.4} parent=5 // pred_region
      %s359 = ssub.s32 %s17, 1
      %p360 = scmp.lt.s32.totalorder %s22, 1
      %s361 = scalar_select %p360, %s22, 1
      %s362 = smul.addr %s361, 4
      %s363 = scalar_lea.vmem %s0, %s362
      %p364 = pneg %p43
      %p365 = pneg %p40
      %p366 = scmp.lt.s32.totalorder %s22, 1
      %s367 = scalar_select %p366, %s22, 1
      %s368 = smul.addr %s367, 4
      %s369 = scalar_lea.vmem %s1, %s368
      %p370 = pneg %p69
      %p371 = pneg %p66
      %p372 = scmp.lt.s32.totalorder %s22, 1
      %s373 = scalar_select %p372, %s22, 1
      %s374 = smul.addr %s373, 8
      %s375 = scalar_lea.vmem %s2, %s374
      %p376 = pneg %p95
      %p377 = pneg %p92
      %p378 = pneg %p116
      %p379 = pneg %p113
      %p380 = pneg %p137
      %p381 = pneg %p134
      %p382 = pneg %p158
      %p383 = pneg %p155
      %p384 = pneg %p179
      %p385 = pneg %p176
      %p386 = pneg %p200
      %p387 = pneg %p197
      %p388 = pneg %p221
      %p389 = pneg %p218
      %p390 = pneg %p242
      %p391 = pneg %p239
      %p392 = pneg %p263
      %p393 = pneg %p260
      %p394 = pneg %p289
      %p395 = pneg %p286
      %p396 = scmp.lt.s32.totalorder %s22, 1
      %s397 = scalar_select %p396, %s22, 1
      %s398 = smul.addr %s397, 4
      %s399 = scalar_lea.vmem %s11, %s398
      %p400 = scmp.lt.s32.totalorder %s22, 1
      %s401 = scalar_select %p400, %s22, 1
      %s402 = smul.addr %s401, 4
      %s403 = scalar_lea.vmem %s0, %s402
      %p404 = scmp.lt.s32.totalorder %s22, 1
      %s405 = scalar_select %p404, %s22, 1
      %s406 = smul.addr %s405, 4
      %s407 = scalar_lea.vmem %s1, %s406
      %p408 = scmp.lt.s32.totalorder %s22, 1
      %s409 = scalar_select %p408, %s22, 1
      %s410 = smul.addr %s409, 8
      %s411 = scalar_lea.vmem %s2, %s410
      %p412 = scmp.lt.s32.totalorder %s22, 1
      %s413 = scalar_select %p412, %s22, 1
      %s414 = smul.addr %s413, 4
      %s415 = scalar_lea.vmem %s11, %s414
      %v417 = vld [vmem:[%s403] sm:$0xf]
      %v418 = vld [vmem:[%s3] sm:$0xf]
      %v419 = vld [vmem:[%s3 + $0x4] sm:$0xf]
      %v420 = vld [vmem:[%s3 + $0x8] sm:$0xf]
      %v421 = vld [vmem:[%s3 + $0xc] sm:$0xf]
      %v422 = vld [vmem:[%s4] sm:$0x1]
      %v424 = vlaneseq
      %v425 = vshrl.u32 %v424, 7
      %v426 = vsub.s32 0, %v425
      %v427 = vrot.slane %v422, %v426
      %v433 = vunpack.c.l.b16 %v418
      %v434 = vunpack.c.l.b16 %v419
      %v435 = vunpack.c.l.b16 %v420
      %v436 = vunpack.c.l.b16 %v421
      %v437 = vpack.c.b16 %v434, %v433
      %v438 = vpack.c.b16 %v436, %v435
      %vm441 = vcmask 261120
      %v443 = vsel %vm441, %v417, 0
      %445 = vmatprep.subr.bf16.mxu0 0
      %446 = vmatpush1.bf16.msra.mxu0 %v437
      %447 = vmatprep.subr.bf16.mxu0 0
      %448 = vmatpush1.bf16.msra.mxu0 %v438
      %449 = vmatprep.subr.bf16.mxu0 0
      %450 = vmatpush1.bf16.msra.mxu0 0
      %451 = vmatprep.subr.bf16.mxu0 0
      %452 = vmatpush1.bf16.msra.mxu0 0
      %453 = vmatprep.subr.bf16.mxu0 0
      %454 = vmatpush1.bf16.msra.mxu0 0
      %455 = vmatprep.subr.bf16.mxu0 0
      %456 = vmatpush1.bf16.msra.mxu0 0
      %457 = vmatprep.subr.bf16.mxu0 0
      %458 = vmatpush1.bf16.msra.mxu0 0
      %459 = vmatprep.subr.bf16.mxu0 0
      %460 = vmatpush1.bf16.msra.mxu0 0
      %461 = vmatprep.subr.bf16.mxu0 0
      %462 = vmatpush1.bf16.msra.mxu0 0
      %463 = vmatprep.subr.bf16.mxu0 0
      %464 = vmatpush1.bf16.msra.mxu0 0
      %465 = vmatprep.subr.bf16.mxu0 0
      %466 = vmatpush1.bf16.msra.mxu0 0
      %467 = vmatprep.subr.bf16.mxu0 0
      %468 = vmatpush1.bf16.msra.mxu0 0
      %469 = vmatprep.subr.bf16.mxu0 0
      %470 = vmatpush1.bf16.msra.mxu0 0
      %471 = vmatprep.subr.bf16.mxu0 0
      %472 = vmatpush1.bf16.msra.mxu0 0
      %473 = vmatprep.subr.bf16.mxu0 0
      %474 = vmatpush1.bf16.msra.mxu0 0
      %475 = vmatprep.subr.bf16.mxu0 0
      %476 = vmatpush1.bf16.msra.mxu0 0
      %477 = vmatprep.mubr.bf16.mxu0 0
      %478 = vmatmul.mubr.bf16.gmra.mrb[0].mxu0 %v443
      %v479 = vpop.f32.mrb[0].mxu0
      %v480 = vadd.f32 %v427, %v479
      %v481 = vpop.f32.mrb[0].mxu0
      %v482 = vpop.f32.mrb[0].mxu0
      %v483 = vpop.f32.mrb[0].mxu0
      %484 = vdwg.mxu0
      %v485 = vld [vmem:[%s407] sm:$0xf]
      %v486 = vld [vmem:[%s5] sm:$0xf]
      %v487 = vld [vmem:[%s5 + $0x4] sm:$0xf]
      %v488 = vld [vmem:[%s5 + $0x8] sm:$0xf]
      %v489 = vld [vmem:[%s5 + $0xc] sm:$0xf]
      %v490 = vld [vmem:[%s6] sm:$0x1]
      %v492 = vlaneseq
      %v493 = vshrl.u32 %v492, 7
      %v494 = vsub.s32 0, %v493
      %v495 = vrot.slane %v490, %v494
      %v501 = vunpack.c.l.b16 %v486
      %v502 = vunpack.c.l.b16 %v487
      %v503 = vunpack.c.l.b16 %v488
      %v504 = vunpack.c.l.b16 %v489
      %v505 = vpack.c.b16 %v502, %v501
      %v506 = vpack.c.b16 %v504, %v503
      %v510 = vsel %vm441, %v485, 0
      %512 = vmatprep.subr.bf16.mxu0 0
      %513 = vmatpush1.bf16.msra.mxu0 %v505
      %514 = vmatprep.subr.bf16.mxu0 0
      %515 = vmatpush1.bf16.msra.mxu0 %v506
      %516 = vmatprep.subr.bf16.mxu0 0
      %517 = vmatpush1.bf16.msra.mxu0 0
      %518 = vmatprep.subr.bf16.mxu0 0
      %519 = vmatpush1.bf16.msra.mxu0 0
      %520 = vmatprep.subr.bf16.mxu0 0
      %521 = vmatpush1.bf16.msra.mxu0 0
      %522 = vmatprep.subr.bf16.mxu0 0
      %523 = vmatpush1.bf16.msra.mxu0 0
      %524 = vmatprep.subr.bf16.mxu0 0
      %525 = vmatpush1.bf16.msra.mxu0 0
      %526 = vmatprep.subr.bf16.mxu0 0
      %527 = vmatpush1.bf16.msra.mxu0 0
      %528 = vmatprep.subr.bf16.mxu0 0
      %529 = vmatpush1.bf16.msra.mxu0 0
      %530 = vmatprep.subr.bf16.mxu0 0
      %531 = vmatpush1.bf16.msra.mxu0 0
      %532 = vmatprep.subr.bf16.mxu0 0
      %533 = vmatpush1.bf16.msra.mxu0 0
      %534 = vmatprep.subr.bf16.mxu0 0
      %535 = vmatpush1.bf16.msra.mxu0 0
      %536 = vmatprep.subr.bf16.mxu0 0
      %537 = vmatpush1.bf16.msra.mxu0 0
      %538 = vmatprep.subr.bf16.mxu0 0
      %539 = vmatpush1.bf16.msra.mxu0 0
      %540 = vmatprep.subr.bf16.mxu0 0
      %541 = vmatpush1.bf16.msra.mxu0 0
      %542 = vmatprep.subr.bf16.mxu0 0
      %543 = vmatpush1.bf16.msra.mxu0 0
      %544 = vmatprep.mubr.bf16.mxu0 0
      %545 = vmatmul.mubr.bf16.gmra.mrb[0].mxu0 %v510
      %v546 = vpop.f32.mrb[0].mxu0
      %v547 = vadd.f32 %v495, %v546
      %v548 = vpop.f32.mrb[0].mxu0
      %v549 = vpop.f32.mrb[0].mxu0
      %v550 = vpop.f32.mrb[0].mxu0
      %551 = vdwg.mxu0
      %v552 = vld [vmem:[%s411] sm:$0xff]
      %v553 = vpack.c.bf16 %v480, %v480
      %v554 = vpack.c.bf16 %v547, %v547
      %vm555 = vcmask 64512
      %v557 = vsel %vm555, %v553, 0
      %v560 = vsel %vm555, %v554, 0
      %562 = vmatprep.subr.bf16.mxu0 0
      %563 = vmatpush1.bf16.xpose.msra.mxu0 %v560
      %564 = vmatprep.subr.bf16.mxu0 0
      %565 = vmatpush1.bf16.xpose.msra.mxu0 0
      %566 = vmatprep.subr.bf16.mxu0 0
      %567 = vmatpush1.bf16.xpose.msra.mxu0 0
      %568 = vmatprep.subr.bf16.mxu0 0
      %569 = vmatpush1.bf16.xpose.msra.mxu0 0
      %570 = vmatprep.subr.bf16.mxu0 0
      %571 = vmatpush1.bf16.xpose.msra.mxu0 0
      %572 = vmatprep.subr.bf16.mxu0 0
      %573 = vmatpush1.bf16.xpose.msra.mxu0 0
      %574 = vmatprep.subr.bf16.mxu0 0
      %575 = vmatpush1.bf16.xpose.msra.mxu0 0
      %576 = vmatprep.subr.bf16.mxu0 0
      %577 = vmatpush1.bf16.xpose.msra.mxu0 0
      %578 = vmatprep.subr.bf16.mxu0 0
      %579 = vmatpush1.bf16.xpose.msra.mxu0 0
      %580 = vmatprep.subr.bf16.mxu0 0
      %581 = vmatpush1.bf16.xpose.msra.mxu0 0
      %582 = vmatprep.subr.bf16.mxu0 0
      %583 = vmatpush1.bf16.xpose.msra.mxu0 0
      %584 = vmatprep.subr.bf16.mxu0 0
      %585 = vmatpush1.bf16.xpose.msra.mxu0 0
      %586 = vmatprep.subr.bf16.mxu0 0
      %587 = vmatpush1.bf16.xpose.msra.mxu0 0
      %588 = vmatprep.subr.bf16.mxu0 0
      %589 = vmatpush1.bf16.xpose.msra.mxu0 0
      %590 = vmatprep.subr.bf16.mxu0 0
      %591 = vmatpush1.bf16.xpose.msra.mxu0 0
      %592 = vmatprep.subr.bf16.mxu0 0
      %593 = vmatpush1.bf16.xpose.msra.mxu0 0
      %594 = vmatprep.mubr.bf16.mxu0 0
      %595 = vmatmul.mubr.bf16.gmra.mrb[0].mxu0 %v557
      %v596 = vpop.f32.mrb[0].mxu0
      %v597 = vadd.f32 0.0, %v596
      %v598 = vpop.f32.mrb[0].mxu0
      %v599 = vpop.f32.mrb[0].mxu0
      %v600 = vpop.f32.mrb[0].mxu0
      %601 = vdwg.mxu0
      %v602 = vmul.f32 %v597, 0.35355338
      %vm603 = vcmp.eq.f32.partialorder %v552, 0.0
      %v604 = vsel %vm603, -1e+09, %v602
      %v605 = vsel %vm555, %v604, -inf
      %606 = vmax.xlane.f32.xlu0 %v605
      %v607 = vpop.xlane.xlu0 %606
      %v608 = vsub.f32 %v604, %v607
      %v609 = vmul.f32 %v608, 1.442695
      %v610 = vpow.pop %v609
      %v611 = vsel %vm555, %v610, 0.0
      %612 = vadd.xlane.f32.xlu0 %v611
      %v613 = vpop.xlane.xlu0 %612
      %v614 = vrcp.pop %v613
      %v615 = vmul.f32 %v610, %v614
      %v616 = vpack.c.bf16 %v615, %v615
      %618 = vrot.lane.b32.xlu0 %v554, 96
      %v619 = vpop.permute.xlu0 %618
      %v621 = vsel %vm555, %v616, 0
      %vm623 = vcmask 1043456
      %v625 = vsel %vm623, %v619, 0
      %627 = vmatprep.subr.bf16.mxu0 0
      %628 = vmatpush1.bf16.msra.mxu0 %v625
      %629 = vmatprep.subr.bf16.mxu0 0
      %630 = vmatpush1.bf16.msra.mxu0 0
      %631 = vmatprep.subr.bf16.mxu0 0
      %632 = vmatpush1.bf16.msra.mxu0 0
      %633 = vmatprep.subr.bf16.mxu0 0
      %634 = vmatpush1.bf16.msra.mxu0 0
      %635 = vmatprep.subr.bf16.mxu0 0
      %636 = vmatpush1.bf16.msra.mxu0 0
      %637 = vmatprep.subr.bf16.mxu0 0
      %638 = vmatpush1.bf16.msra.mxu0 0
      %639 = vmatprep.subr.bf16.mxu0 0
      %640 = vmatpush1.bf16.msra.mxu0 0
      %641 = vmatprep.subr.bf16.mxu0 0
      %642 = vmatpush1.bf16.msra.mxu0 0
      %643 = vmatprep.subr.bf16.mxu0 0
      %644 = vmatpush1.bf16.msra.mxu0 0
      %645 = vmatprep.subr.bf16.mxu0 0
      %646 = vmatpush1.bf16.msra.mxu0 0
      %647 = vmatprep.subr.bf16.mxu0 0
      %648 = vmatpush1.bf16.msra.mxu0 0
      %649 = vmatprep.subr.bf16.mxu0 0
      %650 = vmatpush1.bf16.msra.mxu0 0
      %651 = vmatprep.subr.bf16.mxu0 0
      %652 = vmatpush1.bf16.msra.mxu0 0
      %653 = vmatprep.subr.bf16.mxu0 0
      %654 = vmatpush1.bf16.msra.mxu0 0
      %655 = vmatprep.subr.bf16.mxu0 0
      %656 = vmatpush1.bf16.msra.mxu0 0
      %657 = vmatprep.subr.bf16.mxu0 0
      %658 = vmatpush1.bf16.msra.mxu0 0
      %659 = vmatprep.mubr.bf16.mxu0 0
      %660 = vmatmul.mubr.bf16.gmra.mrb[0].mxu0 %v621
      %v661 = vpop.f32.mrb[0].mxu0
      %v662 = vadd.f32 0.0, %v661
      %v663 = vpop.f32.mrb[0].mxu0
      %v664 = vpop.f32.mrb[0].mxu0
      %v665 = vpop.f32.mrb[0].mxu0
      %666 = vdwg.mxu0
      %668 = vrot.lane.b32.xlu0 %v553, 120
      %v669 = vpop.permute.xlu0 %668
      %670 = vrot.lane.b32.xlu0 %v554, 120
      %v671 = vpop.permute.xlu0 %670
      %v673 = vsel %vm555, %v669, 0
      %v676 = vsel %vm555, %v671, 0
      %678 = vmatprep.subr.bf16.mxu0 0
      %679 = vmatpush1.bf16.xpose.msra.mxu0 %v676
      %680 = vmatprep.subr.bf16.mxu0 0
      %681 = vmatpush1.bf16.xpose.msra.mxu0 0
      %682 = vmatprep.subr.bf16.mxu0 0
      %683 = vmatpush1.bf16.xpose.msra.mxu0 0
      %684 = vmatprep.subr.bf16.mxu0 0
      %685 = vmatpush1.bf16.xpose.msra.mxu0 0
      %686 = vmatprep.subr.bf16.mxu0 0
      %687 = vmatpush1.bf16.xpose.msra.mxu0 0
      %688 = vmatprep.subr.bf16.mxu0 0
      %689 = vmatpush1.bf16.xpose.msra.mxu0 0
      %690 = vmatprep.subr.bf16.mxu0 0
      %691 = vmatpush1.bf16.xpose.msra.mxu0 0
      %692 = vmatprep.subr.bf16.mxu0 0
      %693 = vmatpush1.bf16.xpose.msra.mxu0 0
      %694 = vmatprep.subr.bf16.mxu0 0
      %695 = vmatpush1.bf16.xpose.msra.mxu0 0
      %696 = vmatprep.subr.bf16.mxu0 0
      %697 = vmatpush1.bf16.xpose.msra.mxu0 0
      %698 = vmatprep.subr.bf16.mxu0 0
      %699 = vmatpush1.bf16.xpose.msra.mxu0 0
      %700 = vmatprep.subr.bf16.mxu0 0
      %701 = vmatpush1.bf16.xpose.msra.mxu0 0
      %702 = vmatprep.subr.bf16.mxu0 0
      %703 = vmatpush1.bf16.xpose.msra.mxu0 0
      %704 = vmatprep.subr.bf16.mxu0 0
      %705 = vmatpush1.bf16.xpose.msra.mxu0 0
      %706 = vmatprep.subr.bf16.mxu0 0
      %707 = vmatpush1.bf16.xpose.msra.mxu0 0
      %708 = vmatprep.subr.bf16.mxu0 0
      %709 = vmatpush1.bf16.xpose.msra.mxu0 0
      %710 = vmatprep.mubr.bf16.mxu0 0
      %711 = vmatmul.mubr.bf16.gmra.mrb[0].mxu0 %v673
      %v712 = vpop.f32.mrb[0].mxu0
      %v713 = vadd.f32 0.0, %v712
      %v714 = vpop.f32.mrb[0].mxu0
      %v715 = vpop.f32.mrb[0].mxu0
      %v716 = vpop.f32.mrb[0].mxu0
      %717 = vdwg.mxu0
      %v718 = vmul.f32 %v713, 0.35355338
      %v719 = vsel %vm603, -1e+09, %v718
      %v720 = vsel %vm555, %v719, -inf
      %721 = vmax.xlane.f32.xlu0 %v720
      %v722 = vpop.xlane.xlu0 %721
      %v723 = vsub.f32 %v719, %v722
      %v724 = vmul.f32 %v723, 1.442695
      %v725 = vpow.pop %v724
      %v726 = vsel %vm555, %v725, 0.0
      %727 = vadd.xlane.f32.xlu0 %v726
      %v728 = vpop.xlane.xlu0 %727
      %v729 = vrcp.pop %v728
      %v730 = vmul.f32 %v725, %v729
      %v731 = vpack.c.bf16 %v730, %v730
      %732 = vrot.lane.b32.xlu0 %v554, 88
      %v733 = vpop.permute.xlu0 %732
      %v735 = vsel %vm555, %v731, 0
      %v738 = vsel %vm623, %v733, 0
      %740 = vmatprep.subr.bf16.mxu0 0
      %741 = vmatpush1.bf16.msra.mxu0 %v738
      %742 = vmatprep.subr.bf16.mxu0 0
      %743 = vmatpush1.bf16.msra.mxu0 0
      %744 = vmatprep.subr.bf16.mxu0 0
      %745 = vmatpush1.bf16.msra.mxu0 0
      %746 = vmatprep.subr.bf16.mxu0 0
      %747 = vmatpush1.bf16.msra.mxu0 0
      %748 = vmatprep.subr.bf16.mxu0 0
      %749 = vmatpush1.bf16.msra.mxu0 0
      %750 = vmatprep.subr.bf16.mxu0 0
      %751 = vmatpush1.bf16.msra.mxu0 0
      %752 = vmatprep.subr.bf16.mxu0 0
      %753 = vmatpush1.bf16.msra.mxu0 0
      %754 = vmatprep.subr.bf16.mxu0 0
      %755 = vmatpush1.bf16.msra.mxu0 0
      %756 = vmatprep.subr.bf16.mxu0 0
      %757 = vmatpush1.bf16.msra.mxu0 0
      %758 = vmatprep.subr.bf16.mxu0 0
      %759 = vmatpush1.bf16.msra.mxu0 0
      %760 = vmatprep.subr.bf16.mxu0 0
      %761 = vmatpush1.bf16.msra.mxu0 0
      %762 = vmatprep.subr.bf16.mxu0 0
      %763 = vmatpush1.bf16.msra.mxu0 0
      %764 = vmatprep.subr.bf16.mxu0 0
      %765 = vmatpush1.bf16.msra.mxu0 0
      %766 = vmatprep.subr.bf16.mxu0 0
      %767 = vmatpush1.bf16.msra.mxu0 0
      %768 = vmatprep.subr.bf16.mxu0 0
      %769 = vmatpush1.bf16.msra.mxu0 0
      %770 = vmatprep.subr.bf16.mxu0 0
      %771 = vmatpush1.bf16.msra.mxu0 0
      %772 = vmatprep.mubr.bf16.mxu0 0
      %773 = vmatmul.mubr.bf16.gmra.mrb[0].mxu0 %v735
      %v774 = vpop.f32.mrb[0].mxu0
      %v775 = vadd.f32 0.0, %v774
      %v776 = vpop.f32.mrb[0].mxu0
      %v777 = vpop.f32.mrb[0].mxu0
      %v778 = vpop.f32.mrb[0].mxu0
      %779 = vdwg.mxu0
      %780 = vrot.lane.b32.xlu0 %v553, 112
      %v781 = vpop.permute.xlu0 %780
      %782 = vrot.lane.b32.xlu0 %v554, 112
      %v783 = vpop.permute.xlu0 %782
      %v785 = vsel %vm555, %v781, 0
      %v788 = vsel %vm555, %v783, 0
      %790 = vmatprep.subr.bf16.mxu0 0
      %791 = vmatpush1.bf16.xpose.msra.mxu0 %v788
      %792 = vmatprep.subr.bf16.mxu0 0
      %793 = vmatpush1.bf16.xpose.msra.mxu0 0
      %794 = vmatprep.subr.bf16.mxu0 0
      %795 = vmatpush1.bf16.xpose.msra.mxu0 0
      %796 = vmatprep.subr.bf16.mxu0 0
      %797 = vmatpush1.bf16.xpose.msra.mxu0 0
      %798 = vmatprep.subr.bf16.mxu0 0
      %799 = vmatpush1.bf16.xpose.msra.mxu0 0
      %800 = vmatprep.subr.bf16.mxu0 0
      %801 = vmatpush1.bf16.xpose.msra.mxu0 0
      %802 = vmatprep.subr.bf16.mxu0 0
      %803 = vmatpush1.bf16.xpose.msra.mxu0 0
      %804 = vmatprep.subr.bf16.mxu0 0
      %805 = vmatpush1.bf16.xpose.msra.mxu0 0
      %806 = vmatprep.subr.bf16.mxu0 0
      %807 = vmatpush1.bf16.xpose.msra.mxu0 0
      %808 = vmatprep.subr.bf16.mxu0 0
      %809 = vmatpush1.bf16.xpose.msra.mxu0 0
      %810 = vmatprep.subr.bf16.mxu0 0
      %811 = vmatpush1.bf16.xpose.msra.mxu0 0
      %812 = vmatprep.subr.bf16.mxu0 0
      %813 = vmatpush1.bf16.xpose.msra.mxu0 0
      %814 = vmatprep.subr.bf16.mxu0 0
      %815 = vmatpush1.bf16.xpose.msra.mxu0 0
      %816 = vmatprep.subr.bf16.mxu0 0
      %817 = vmatpush1.bf16.xpose.msra.mxu0 0
      %818 = vmatprep.subr.bf16.mxu0 0
      %819 = vmatpush1.bf16.xpose.msra.mxu0 0
      %820 = vmatprep.subr.bf16.mxu0 0
      %821 = vmatpush1.bf16.xpose.msra.mxu0 0
      %822 = vmatprep.mubr.bf16.mxu0 0
      %823 = vmatmul.mubr.bf16.gmra.mrb[0].mxu0 %v785
      %v824 = vpop.f32.mrb[0].mxu0
      %v825 = vadd.f32 0.0, %v824
      %v826 = vpop.f32.mrb[0].mxu0
      %v827 = vpop.f32.mrb[0].mxu0
      %v828 = vpop.f32.mrb[0].mxu0
      %829 = vdwg.mxu0
      %v830 = vmul.f32 %v825, 0.35355338
      %v831 = vsel %vm603, -1e+09, %v830
      %v832 = vsel %vm555, %v831, -inf
      %833 = vmax.xlane.f32.xlu0 %v832
      %v834 = vpop.xlane.xlu0 %833
      %v835 = vsub.f32 %v831, %v834
      %v836 = vmul.f32 %v835, 1.442695
      %v837 = vpow.pop %v836
      %v838 = vsel %vm555, %v837, 0.0
      %839 = vadd.xlane.f32.xlu0 %v838
      %v840 = vpop.xlane.xlu0 %839
      %v841 = vrcp.pop %v840
      %v842 = vmul.f32 %v837, %v841
      %v843 = vpack.c.bf16 %v842, %v842
      %844 = vrot.lane.b32.xlu0 %v554, 80
      %v845 = vpop.permute.xlu0 %844
      %v847 = vsel %vm555, %v843, 0
      %v850 = vsel %vm623, %v845, 0
      %852 = vmatprep.subr.bf16.mxu0 0
      %853 = vmatpush1.bf16.msra.mxu0 %v850
      %854 = vmatprep.subr.bf16.mxu0 0
      %855 = vmatpush1.bf16.msra.mxu0 0
      %856 = vmatprep.subr.bf16.mxu0 0
      %857 = vmatpush1.bf16.msra.mxu0 0
      %858 = vmatprep.subr.bf16.mxu0 0
      %859 = vmatpush1.bf16.msra.mxu0 0
      %860 = vmatprep.subr.bf16.mxu0 0
      %861 = vmatpush1.bf16.msra.mxu0 0
      %862 = vmatprep.subr.bf16.mxu0 0
      %863 = vmatpush1.bf16.msra.mxu0 0
      %864 = vmatprep.subr.bf16.mxu0 0
      %865 = vmatpush1.bf16.msra.mxu0 0
      %866 = vmatprep.subr.bf16.mxu0 0
      %867 = vmatpush1.bf16.msra.mxu0 0
      %868 = vmatprep.subr.bf16.mxu0 0
      %869 = vmatpush1.bf16.msra.mxu0 0
      %870 = vmatprep.subr.bf16.mxu0 0
      %871 = vmatpush1.bf16.msra.mxu0 0
      %872 = vmatprep.subr.bf16.mxu0 0
      %873 = vmatpush1.bf16.msra.mxu0 0
      %874 = vmatprep.subr.bf16.mxu0 0
      %875 = vmatpush1.bf16.msra.mxu0 0
      %876 = vmatprep.subr.bf16.mxu0 0
      %877 = vmatpush1.bf16.msra.mxu0 0
      %878 = vmatprep.subr.bf16.mxu0 0
      %879 = vmatpush1.bf16.msra.mxu0 0
      %880 = vmatprep.subr.bf16.mxu0 0
      %881 = vmatpush1.bf16.msra.mxu0 0
      %882 = vmatprep.subr.bf16.mxu0 0
      %883 = vmatpush1.bf16.msra.mxu0 0
      %884 = vmatprep.mubr.bf16.mxu0 0
      %885 = vmatmul.mubr.bf16.gmra.mrb[0].mxu0 %v847
      %v886 = vpop.f32.mrb[0].mxu0
      %v887 = vadd.f32 0.0, %v886
      %v888 = vpop.f32.mrb[0].mxu0
      %v889 = vpop.f32.mrb[0].mxu0
      %v890 = vpop.f32.mrb[0].mxu0
      %891 = vdwg.mxu0
      %892 = vrot.lane.b32.xlu0 %v553, 104
      %v893 = vpop.permute.xlu0 %892
      %894 = vrot.lane.b32.xlu0 %v554, 104
      %v895 = vpop.permute.xlu0 %894
      %v897 = vsel %vm555, %v893, 0
      %v900 = vsel %vm555, %v895, 0
      %902 = vmatprep.subr.bf16.mxu0 0
      %903 = vmatpush1.bf16.xpose.msra.mxu0 %v900
      %904 = vmatprep.subr.bf16.mxu0 0
      %905 = vmatpush1.bf16.xpose.msra.mxu0 0
      %906 = vmatprep.subr.bf16.mxu0 0
      %907 = vmatpush1.bf16.xpose.msra.mxu0 0
      %908 = vmatprep.subr.bf16.mxu0 0
      %909 = vmatpush1.bf16.xpose.msra.mxu0 0
      %910 = vmatprep.subr.bf16.mxu0 0
      %911 = vmatpush1.bf16.xpose.msra.mxu0 0
      %912 = vmatprep.subr.bf16.mxu0 0
      %913 = vmatpush1.bf16.xpose.msra.mxu0 0
      %914 = vmatprep.subr.bf16.mxu0 0
      %915 = vmatpush1.bf16.xpose.msra.mxu0 0
      %916 = vmatprep.subr.bf16.mxu0 0
      %917 = vmatpush1.bf16.xpose.msra.mxu0 0
      %918 = vmatprep.subr.bf16.mxu0 0
      %919 = vmatpush1.bf16.xpose.msra.mxu0 0
      %920 = vmatprep.subr.bf16.mxu0 0
      %921 = vmatpush1.bf16.xpose.msra.mxu0 0
      %922 = vmatprep.subr.bf16.mxu0 0
      %923 = vmatpush1.bf16.xpose.msra.mxu0 0
      %924 = vmatprep.subr.bf16.mxu0 0
      %925 = vmatpush1.bf16.xpose.msra.mxu0 0
      %926 = vmatprep.subr.bf16.mxu0 0
      %927 = vmatpush1.bf16.xpose.msra.mxu0 0
      %928 = vmatprep.subr.bf16.mxu0 0
      %929 = vmatpush1.bf16.xpose.msra.mxu0 0
      %930 = vmatprep.subr.bf16.mxu0 0
      %931 = vmatpush1.bf16.xpose.msra.mxu0 0
      %932 = vmatprep.subr.bf16.mxu0 0
      %933 = vmatpush1.bf16.xpose.msra.mxu0 0
      %934 = vmatprep.mubr.bf16.mxu0 0
      %935 = vmatmul.mubr.bf16.gmra.mrb[0].mxu0 %v897
      %v936 = vpop.f32.mrb[0].mxu0
      %v937 = vadd.f32 0.0, %v936
      %v938 = vpop.f32.mrb[0].mxu0
      %v939 = vpop.f32.mrb[0].mxu0
      %v940 = vpop.f32.mrb[0].mxu0
      %941 = vdwg.mxu0
      %v942 = vmul.f32 %v937, 0.35355338
      %v943 = vsel %vm603, -1e+09, %v942
      %v944 = vsel %vm555, %v943, -inf
      %945 = vmax.xlane.f32.xlu0 %v944
      %v946 = vpop.xlane.xlu0 %945
      %v947 = vsub.f32 %v943, %v946
      %v948 = vmul.f32 %v947, 1.442695
      %v949 = vpow.pop %v948
      %v950 = vsel %vm555, %v949, 0.0
      %951 = vadd.xlane.f32.xlu0 %v950
      %v952 = vpop.xlane.xlu0 %951
      %v953 = vrcp.pop %v952
      %v954 = vmul.f32 %v949, %v953
      %v955 = vpack.c.bf16 %v954, %v954
      %956 = vrot.lane.b32.xlu0 %v554, 72
      %v957 = vpop.permute.xlu0 %956
      %v959 = vsel %vm555, %v955, 0
      %v962 = vsel %vm623, %v957, 0
      %964 = vmatprep.subr.bf16.mxu0 0
      %965 = vmatpush1.bf16.msra.mxu0 %v962
      %966 = vmatprep.subr.bf16.mxu0 0
      %967 = vmatpush1.bf16.msra.mxu0 0
      %968 = vmatprep.subr.bf16.mxu0 0
      %969 = vmatpush1.bf16.msra.mxu0 0
      %970 = vmatprep.subr.bf16.mxu0 0
      %971 = vmatpush1.bf16.msra.mxu0 0
      %972 = vmatprep.subr.bf16.mxu0 0
      %973 = vmatpush1.bf16.msra.mxu0 0
      %974 = vmatprep.subr.bf16.mxu0 0
      %975 = vmatpush1.bf16.msra.mxu0 0
      %976 = vmatprep.subr.bf16.mxu0 0
      %977 = vmatpush1.bf16.msra.mxu0 0
      %978 = vmatprep.subr.bf16.mxu0 0
      %979 = vmatpush1.bf16.msra.mxu0 0
      %980 = vmatprep.subr.bf16.mxu0 0
      %981 = vmatpush1.bf16.msra.mxu0 0
      %982 = vmatprep.subr.bf16.mxu0 0
      %983 = vmatpush1.bf16.msra.mxu0 0
      %984 = vmatprep.subr.bf16.mxu0 0
      %985 = vmatpush1.bf16.msra.mxu0 0
      %986 = vmatprep.subr.bf16.mxu0 0
      %987 = vmatpush1.bf16.msra.mxu0 0
      %988 = vmatprep.subr.bf16.mxu0 0
      %989 = vmatpush1.bf16.msra.mxu0 0
      %990 = vmatprep.subr.bf16.mxu0 0
      %991 = vmatpush1.bf16.msra.mxu0 0
      %992 = vmatprep.subr.bf16.mxu0 0
      %993 = vmatpush1.bf16.msra.mxu0 0
      %994 = vmatprep.subr.bf16.mxu0 0
      %995 = vmatpush1.bf16.msra.mxu0 0
      %996 = vmatprep.mubr.bf16.mxu0 0
      %997 = vmatmul.mubr.bf16.gmra.mrb[0].mxu0 %v959
      %v998 = vpop.f32.mrb[0].mxu0
      %v999 = vadd.f32 0.0, %v998
      %v1000 = vpop.f32.mrb[0].mxu0
      %v1001 = vpop.f32.mrb[0].mxu0
      %v1002 = vpop.f32.mrb[0].mxu0
      %1003 = vdwg.mxu0
      %1005 = vrot.lane.b32.xlu0 %v775, 8
      %v1006 = vpop.permute.xlu0 %1005
      %1009 = vrot.lane.b32.xlu0 %v887, 16
      %v1010 = vpop.permute.xlu0 %1009
      %1013 = vrot.lane.b32.xlu0 %v999, 24
      %v1014 = vpop.permute.xlu0 %1013
      %v1016 = vsel %vm555, %v662, %v1006
      %vm1017 = vcmask 130048
      %v1018 = vsel %vm1017, %v1016, %v1010
      %vm1019 = vcmask 195584
      %v1020 = vsel %vm1019, %v1018, %v1014
      %v1021 = vpack.c.bf16 %v1020, %v1020
      %v1022 = vld [vmem:[%s7] sm:$0xf]
      %v1023 = vld [vmem:[%s7 + $0x4] sm:$0xf]
      %v1024 = vld [vmem:[%s7 + $0x8] sm:$0xf]
      %v1025 = vld [vmem:[%s7 + $0xc] sm:$0xf]
      %v1026 = vld [vmem:[%s8] sm:$0x1]
      %v1028 = vlaneseq
      %v1029 = vshrl.u32 %v1028, 7
      %v1030 = vsub.s32 0, %v1029
      %v1031 = vrot.slane %v1026, %v1030
      %v1037 = vunpack.c.l.b16 %v1022
      %v1038 = vunpack.c.l.b16 %v1023
      %v1039 = vunpack.c.l.b16 %v1024
      %v1040 = vunpack.c.l.b16 %v1025
      %v1041 = vpack.c.b16 %v1038, %v1037
      %v1042 = vpack.c.b16 %v1040, %v1039
      %v1046 = vsel %vm441, %v1021, 0
      %1048 = vmatprep.subr.bf16.mxu0 0
      %1049 = vmatpush1.bf16.msra.mxu0 %v1041
      %1050 = vmatprep.subr.bf16.mxu0 0
      %1051 = vmatpush1.bf16.msra.mxu0 %v1042
      %1052 = vmatprep.subr.bf16.mxu0 0
      %1053 = vmatpush1.bf16.msra.mxu0 0
      %1054 = vmatprep.subr.bf16.mxu0 0
      %1055 = vmatpush1.bf16.msra.mxu0 0
      %1056 = vmatprep.subr.bf16.mxu0 0
      %1057 = vmatpush1.bf16.msra.mxu0 0
      %1058 = vmatprep.subr.bf16.mxu0 0
      %1059 = vmatpush1.bf16.msra.mxu0 0
      %1060 = vmatprep.subr.bf16.mxu0 0
      %1061 = vmatpush1.bf16.msra.mxu0 0
      %1062 = vmatprep.subr.bf16.mxu0 0
      %1063 = vmatpush1.bf16.msra.mxu0 0
      %1064 = vmatprep.subr.bf16.mxu0 0
      %1065 = vmatpush1.bf16.msra.mxu0 0
      %1066 = vmatprep.subr.bf16.mxu0 0
      %1067 = vmatpush1.bf16.msra.mxu0 0
      %1068 = vmatprep.subr.bf16.mxu0 0
      %1069 = vmatpush1.bf16.msra.mxu0 0
      %1070 = vmatprep.subr.bf16.mxu0 0
      %1071 = vmatpush1.bf16.msra.mxu0 0
      %1072 = vmatprep.subr.bf16.mxu0 0
      %1073 = vmatpush1.bf16.msra.mxu0 0
      %1074 = vmatprep.subr.bf16.mxu0 0
      %1075 = vmatpush1.bf16.msra.mxu0 0
      %1076 = vmatprep.subr.bf16.mxu0 0
      %1077 = vmatpush1.bf16.msra.mxu0 0
      %1078 = vmatprep.subr.bf16.mxu0 0
      %1079 = vmatpush1.bf16.msra.mxu0 0
      %1080 = vmatprep.mubr.bf16.mxu0 0
      %1081 = vmatmul.mubr.bf16.gmra.mrb[0].mxu0 %v1046
      %v1082 = vpop.f32.mrb[0].mxu0
      %v1083 = vadd.f32 %v1031, %v1082
      %v1084 = vpop.f32.mrb[0].mxu0
      %v1085 = vpop.f32.mrb[0].mxu0
      %v1086 = vpop.f32.mrb[0].mxu0
      %1087 = vdwg.mxu0
      %v1088 = vsel %vm441, %v1083, 0.0
      %1089 = vadd.xlane.f32.xlu0 %v1088
      %v1090 = vpop.xlane.xlu0 %1089
      %v1091 = vrcp.pop 32.0
      %v1092 = vmul.f32 %v1090, %v1091
      %v1093 = vsub.f32 %v1083, %v1092
      %v1094 = vmul.f32 %v1093, %v1093
      %v1095 = vsel %vm441, %v1094, 0.0
      %1096 = vadd.xlane.f32.xlu0 %v1095
      %v1097 = vpop.xlane.xlu0 %1096
      %v1098 = vmul.f32 %v1097, %v1091
      %v1099 = vadd.f32 %v1098, 1e-05
      %v1100 = vrsqrt.pop %v1099
      %v1101 = vmul.f32 %v1093, %v1100
      %v1102 = vld [vmem:[%s9] sm:$0x1]
      %v1104 = vlaneseq
      %v1105 = vshrl.u32 %v1104, 7
      %v1106 = vsub.s32 0, %v1105
      %v1107 = vrot.slane %v1102, %v1106
      %v1109 = vmul.f32 %v1101, %v1107
      %v1110 = vld [vmem:[%s10] sm:$0x1]
      %v1112 = vlaneseq
      %v1113 = vshrl.u32 %v1112, 7
      %v1114 = vsub.s32 0, %v1113
      %v1115 = vrot.slane %v1110, %v1114
      %v1117 = vadd.f32 %v1109, %v1115
      %v1118 = vpack.c.bf16 %v1117, %v1117
      %vm1119 = vcmask 257024
      %1120 = vst.msk [vmem:[%s415] sm:$0xf] %vm1119, %v1118
      %p1121 = scmp.lt.s32.totalorder %s22, 1
      %s1122 = scalar_select %p1121, %s22, 1
      %s1123 = smul.addr %s1122, 4
      %s1124 = scalar_lea.vmem %s11, %s1123
      // Predicated region
      $region65: #{decoder_forward.4} parent=63 // pred_check
        %p1125 = pneg %p286
      $region66: #{decoder_forward.4} parent=63 // pred_check_branch
        %1127 = sbr.rel (%p1125) target = $region68
      $region67: #{decoder_forward.4} parent=63 // pred_region
        _
      $region68: #{decoder_forward.4} parent=63 // pred_fallthru
        _
    $region64: #{decoder_forward.4} parent=5 // pred_fallthru
      _
    %p1128 = scmp.le.s32.totalorder 2, %s17
    // Predicated region
    $region69: #{decoder_forward.4} parent=5 // pred_check
      %p1129 = pneg %p1128
    $region70: #{decoder_forward.4} parent=5 // pred_check_branch
      %1131 = sbr.rel (%p1129) target = $region72
    $region71: #{decoder_forward.4} parent=5 // pred_region
      %s1132 = ssub.s32 %s17, 2
      // Predicated region
      $region73: #{decoder_forward.4} parent=71 // pred_check
        %p1133 = pneg %p292
      $region74: #{decoder_forward.4} parent=71 // pred_check_branch
        %1135 = sbr.rel (%p1133) target = $region76
      $region75: #{decoder_forward.4} parent=71 // pred_region
        %p1136 = scmp.lt.s32.totalorder %s23, 1
        %s1137 = scalar_select %p1136, %s23, 1
        %s1138 = smul.addr %s1137, 4
        %s1139 = scalar_lea.vmem %s11, %s1138
      $region76: #{decoder_forward.4} parent=71 // pred_fallthru
        _
    $region72: #{decoder_forward.4} parent=5 // pred_fallthru
      _
  $region6: #{decoder_forward.4} parent=0 // loop_footer
    %s21 = sadd.s32 1, %s17
  $region7: #{decoder_forward.4} parent=0 // loop_footer_branch
    %16 = sbr.rel target = $region3
  $region8: #{decoder_forward.4} parent=0 // loop_exit
    _

</llo_original>
